<compile_context>
chip_gen: v7x
topology: tpu7x:2x2x1
jax: 0.10.0
libtpu: 0.0.40
codegen_flags: <defaults>
</compile_context>

<pallas_src>
import numpy as np

import jax
import jax.numpy as jnp
from jax import lax
from jax.experimental import pallas as pl
from jax.experimental.pallas import tpu as pltpu

EPS = 1e-5
ACT_DTYPE = jnp.bfloat16          # dtype of the y1/y2 intermediates in HBM
VMEM_LIMIT = 32 * 1024 * 1024     # explicit scoped-VMEM limit (safe on v5e..v7x)


# ---------------------------------------------------------------------------
# Pallas kernels
# ---------------------------------------------------------------------------
def _conv3x3_body(x_ref, w_ref, scale_ref, shift_ref, o_ref, sum_ref, sq_ref):
    """3x3 VALID conv on one batch element, width-packed layout.

    x_ref:            (1, H, W*Cin)        rows; channels packed into lanes
    w_ref:            (3, W*Cin, Wo*Cout)  per-kh block-Toeplitz weights
    scale/shift_ref:  (1, W*Cin) or None   fused BN+ReLU of producing layer
    o_ref:            (1, Ho, Wo*Cout)     output, already in consumer layout
    sum_ref/sq_ref:   (1, 1, Wo*Cout)      f32 per-batch BN-stat partials
    """
    x = x_ref[0].astype(jnp.float32)                      # (H, W*Cin)
    if scale_ref is not None:
        x = jnp.maximum(x * scale_ref[0] + shift_ref[0], 0.0)
    ho = o_ref.shape[1]
    # Three MXU dots; the kh "shift" is only a leading(-sublane)-dim slice.
    # No im2col copies, no lane repacking.  Conv bias omitted (cancels exactly
    # under the following training-mode BatchNorm).
    acc = jnp.dot(x[0:ho], w_ref[0], preferred_element_type=jnp.float32)
    acc = acc + jnp.dot(x[1:1 + ho], w_ref[1], preferred_element_type=jnp.float32)
    acc = acc + jnp.dot(x[2:2 + ho], w_ref[2], preferred_element_type=jnp.float32)
    o_ref[0] = acc.astype(o_ref.dtype)                    # bf16 store, dense
    # BN batch-stat partials from the f32 accumulator (no HBM re-read, no bf16
    # loss); final per-channel reduction happens in tiny XLA glue.
    sum_ref[0] = jnp.sum(acc, axis=0, keepdims=True)
    sq_ref[0] = jnp.sum(acc * acc, axis=0, keepdims=True)


def _conv3x3_bn_kernel(x_ref, w_ref, scale_ref, shift_ref,
                       o_ref, sum_ref, sq_ref):
    _conv3x3_body(x_ref, w_ref, scale_ref, shift_ref, o_ref, sum_ref, sq_ref)


def _conv3x3_plain_kernel(x_ref, w_ref, o_ref, sum_ref, sq_ref):
    _conv3x3_body(x_ref, w_ref, None, None, o_ref, sum_ref, sq_ref)


def _deconv2x2_kernel(z_ref, w_ref, b_ref, scale_ref, shift_ref, o_ref):
    """Fused BN+ReLU then 2x2 stride-2 transposed conv as ONE matmul.

    z_ref:   (1, Hi, Wi*Cm)         bf16 input (packed width)
    w_ref:   (Wi*Cm, 2*Wi*2*Cout)   precomputed; column order = final
                                    (di, j, dj, co) row-major packing
    b_ref:   (1, 2*Wi*2*Cout)       bias tiled over (di, j, dj)
    o_ref:   (1, Hi, 2*Wi*2*Cout)   single dense store; wrapper reshape to
                                    (2*Hi, 2*Wi, Cout) is contiguous/free.
    """
    z = jnp.maximum(
        z_ref[0].astype(jnp.float32) * scale_ref[0] + shift_ref[0], 0.0)
    y = jnp.dot(z, w_ref[...], preferred_element_type=jnp.float32) + b_ref[0]
    o_ref[0] = y.astype(o_ref.dtype)


# ---------------------------------------------------------------------------
# pallas_call wrappers
# ---------------------------------------------------------------------------
def conv3x3_packed(x, w_packed, ho, scale=None, shift=None,
                   out_dtype=ACT_DTYPE):
    """x: (N, H, W*Cin) -> (y (N, Ho, Wo*Cout), per-batch sum, sumsq)."""
    N, H, WC = x.shape
    woC = w_packed.shape[-1]

    in_specs = [
        pl.BlockSpec((1, H, WC), lambda n: (n, 0, 0)),
        pl.BlockSpec((3, WC, woC), lambda n: (0, 0, 0)),
    ]
    args = [x, w_packed]
    if scale is not None:
        in_specs += [pl.BlockSpec((1, WC), lambda n: (0, 0)),
                     pl.BlockSpec((1, WC), lambda n: (0, 0))]
        args += [scale, shift]
        kern = _conv3x3_bn_kernel
    else:
        kern = _conv3x3_plain_kernel

    out_shape = (
        jax.ShapeDtypeStruct((N, ho, woC), out_dtype),
        jax.ShapeDtypeStruct((N, 1, woC), jnp.float32),
        jax.ShapeDtypeStruct((N, 1, woC), jnp.float32),
    )
    out_specs = (
        pl.BlockSpec((1, ho, woC), lambda n: (n, 0, 0)),
        pl.BlockSpec((1, 1, woC), lambda n: (n, 0, 0)),
        pl.BlockSpec((1, 1, woC), lambda n: (n, 0, 0)),
    )
    return pl.pallas_call(
        kern,
        out_shape=out_shape,
        grid=(N,),
        in_specs=in_specs,
        out_specs=out_specs,
        compiler_params=pltpu.CompilerParams(
            dimension_semantics=("parallel",),
            vmem_limit_bytes=VMEM_LIMIT),
    )(*args)


def deconv2x2_packed(z, wt_packed, bt_packed, scale, shift):
    """z: (N, Hi, Wi*Cm) -> (N, Hi, 2*Wi*2*Cout) in final row-major packing."""
    N, hi, WC = z.shape
    L = wt_packed.shape[-1]
    return pl.pallas_call(
        _deconv2x2_kernel,
        out_shape=jax.ShapeDtypeStruct((N, hi, L), jnp.float32),
        grid=(N,),
        in_specs=[
            pl.BlockSpec((1, hi, WC), lambda n: (n, 0, 0)),
            pl.BlockSpec((WC, L), lambda n: (0, 0)),
            pl.BlockSpec((1, L), lambda n: (0, 0)),
            pl.BlockSpec((1, WC), lambda n: (0, 0)),
            pl.BlockSpec((1, WC), lambda n: (0, 0)),
        ],
        out_specs=pl.BlockSpec((1, hi, L), lambda n: (n, 0, 0)),
        compiler_params=pltpu.CompilerParams(
            dimension_semantics=("parallel",),
            vmem_limit_bytes=VMEM_LIMIT),
    )(z, wt_packed, bt_packed, scale, shift)


# ---------------------------------------------------------------------------
# Weight packing (hoisted out of the jitted forward; runs once)
# ---------------------------------------------------------------------------
def _pack_conv3x3(w, w_in):
    """w: (3,3,Cin,Cout) HWIO -> (3, w_in*Cin, (w_in-2)*Cout) block-Toeplitz.

    big[kh, (q+kw)*Cin+ci, q*Cout+co] = w[kh, kw, ci, co]
    """
    _, _, cin, cout = w.shape
    wo = w_in - 2
    mats = []
    for kh in range(3):
        m = jnp.zeros((w_in * cin, wo * cout), jnp.float32)
        for kw in range(3):
            sel = jnp.asarray(np.eye(w_in, wo, k=-kw), jnp.float32)
            m = m + jnp.kron(sel, w[kh, kw].astype(jnp.float32))
        mats.append(m)
    return jnp.stack(mats, axis=0)


def _pack_deconv2x2(wt4, bt, wo):
    """wt4: (4=(di*2+dj), Cm, Cout) -> ((wo*Cm), (2*wo*2*Cout)), bias (1, ...).

    Column order di*(wo*2*Cout) + j*(2*Cout) + dj*Cout + co, i.e. exactly the
    row-major packing of the final (2h, 2w, Cout) output.
    """
    cm, cout = wt4.shape[1], wt4.shape[2]
    wt = wt4.reshape(2, 2, cm, cout).astype(jnp.float32)      # (di, dj, cm, co)
    eye = jnp.eye(wo, dtype=jnp.float32)
    halves = []
    for di in range(2):
        blk = jnp.transpose(wt[di], (1, 0, 2)).reshape(cm, 2 * cout)
        halves.append(jnp.kron(eye, blk))                     # (wo*cm, wo*2*cout)
    big = jnp.concatenate(halves, axis=1)                     # (wo*cm, 2*wo*2*cout)
    bp = jnp.tile(bt.reshape(-1), (2 * wo * 2,)).reshape(1, -1)
    return big, bp


def prepare_packed_params(p, H, W):
    """Pre-build all packed weights for a given input spatial size (no jit)."""
    wo1, wo2 = W - 2, W - 4
    pp = dict(p)
    pp["w1p"] = _pack_conv3x3(p["w1"], W)
    pp["w2p"] = _pack_conv3x3(p["w2"], wo1)
    pp["wtp"], pp["btp"] = _pack_deconv2x2(p["wt4"], p["bt"], wo2)
    return pp


# ---------------------------------------------------------------------------
# Plain-JAX glue (tiny per-channel BN finalization from kernel-emitted stats)
# ---------------------------------------------------------------------------
def _bn_from_packed_stats(s, sq, count, c, gamma, beta):
    """(N,1,Wo*C) partial sums -> per-channel BN scale/shift, shape (1, C).

    Note: E[x^2]-E[x]^2 in f32 is fine at these sizes; use mean-shifted /
    Welford accumulation at production scale.
    """
    tot = jnp.sum(s.reshape(s.shape[0], -1, c), axis=(0, 1))
    tot_sq = jnp.sum(sq.reshape(sq.shape[0], -1, c), axis=(0, 1))
    mean = tot / count
    var = jnp.maximum(tot_sq / count - mean * mean, 0.0)      # biased variance
    scale = gamma * lax.rsqrt(var + EPS)
    shift = beta - mean * scale
    return scale[None, :], shift[None, :]


def decoder_block_forward(x_nchw, pp):
    """Forward pass of _DecoderBlock. Input/output are NCHW (PyTorch layout)."""
    N, cin, H, W = x_nchw.shape
    cm = pp["g1"].shape[0]
    cout = pp["bt"].shape[-1]
    ho1, wo1 = H - 2, W - 2
    ho2, wo2 = H - 4, W - 4

    # NCHW -> width-packed (N, H, W*Cin). Single input-side XLA transpose.
    x = jnp.transpose(x_nchw, (0, 2, 3, 1)).astype(jnp.float32)
    x = x.reshape(N, H, W * cin)

    # conv1 (+ in-kernel BN-stat partials)
    y1, s1, q1 = conv3x3_packed(x, pp["w1p"], ho1)
    sc1, sh1 = _bn_from_packed_stats(s1, q1, N * ho1 * wo1, cm,
                                     pp["g1"], pp["be1"])
    sc1t = jnp.tile(sc1, (1, wo1))                            # (1, wo1*cm)
    sh1t = jnp.tile(sh1, (1, wo1))

    # BN1+ReLU fused into conv2
    y2, s2, q2 = conv3x3_packed(y1, pp["w2p"], ho2, sc1t, sh1t)
    sc2, sh2 = _bn_from_packed_stats(s2, q2, N * ho2 * wo2, cm,
                                     pp["g2"], pp["be2"])
    sc2t = jnp.tile(sc2, (1, wo2))                            # (1, wo2*cm)
    sh2t = jnp.tile(sh2, (1, wo2))

    # BN2+ReLU fused into the transposed conv; output already in final packing.
    out = deconv2x2_packed(y2, pp["wtp"], pp["btp"], sc2t, sh2t)
    out = out.reshape(N, 2 * ho2, 2 * wo2, cout)              # contiguous/free
    return jnp.transpose(out, (0, 3, 1, 2))                   # -> NCHW


# ---------------------------------------------------------------------------
# Parameters & pure-JAX reference
# ---------------------------------------------------------------------------
def init_params(key, in_ch, mid_ch, out_ch):
    ks = jax.random.split(key, 10)
    return {
        "w1": 0.2 * jax.random.normal(ks[0], (3, 3, in_ch, mid_ch), jnp.float32),
        "b1": 0.1 * jax.random.normal(ks[1], (1, mid_ch), jnp.float32),
        "g1": 1.0 + 0.1 * jax.random.normal(ks[2], (mid_ch,), jnp.float32),
        "be1": 0.1 * jax.random.normal(ks[3], (mid_ch,), jnp.float32),
        "w2": 0.2 * jax.random.normal(ks[4], (3, 3, mid_ch, mid_ch), jnp.float32),
        "b2": 0.1 * jax.random.normal(ks[5], (1, mid_ch), jnp.float32),
        "g2": 1.0 + 0.1 * jax.random.normal(ks[6], (mid_ch,), jnp.float32),
        "be2": 0.1 * jax.random.normal(ks[7], (mid_ch,), jnp.float32),
        # ConvTranspose2d weight laid out as (di*2+dj, Cm, Cout).
        # NOTE: real PyTorch ConvTranspose2d weights are (Cm, Cout, 2, 2) and
        # need transpose(2,3,0,1).reshape(4,Cm,Cout) when porting checkpoints.
        "wt4": 0.2 * jax.random.normal(ks[8], (4, mid_ch, out_ch), jnp.float32),
        "bt": 0.1 * jax.random.normal(ks[9], (1, out_ch), jnp.float32),
    }


def reference_forward(x_nchw, p):
    """Pure-JAX f32 reference (includes conv biases; they cancel under BN)."""
    x = jnp.transpose(x_nchw, (0, 2, 3, 1)).astype(jnp.float32)

    def conv(x, w, b):
        y = lax.conv_general_dilated(
            x, w, window_strides=(1, 1), padding="VALID",
            dimension_numbers=("NHWC", "HWIO", "NHWC"))
        return y + b[0]

    def bn_relu(y, gamma, beta):
        mean = y.mean(axis=(0, 1, 2))
        var = ((y - mean) ** 2).mean(axis=(0, 1, 2))
        return jnp.maximum((y - mean) * lax.rsqrt(var + EPS) * gamma + beta, 0.0)

    y1 = conv(x, p["w1"], p["b1"])
    a1 = bn_relu(y1, p["g1"], p["be1"])
    y2 = conv(a1, p["w2"], p["b2"])
    a2 = bn_relu(y2, p["g2"], p["be2"])
    mid, out = p["wt4"].shape[1], p["wt4"].shape[2]
    wt = p["wt4"].reshape(2, 2, mid, out)
    out6 = jnp.einsum("nijc,pqco->nipjqo", a2, wt)
    n, hi, _, wi, _, co = out6.shape
    y = out6.reshape(n, 2 * hi, 2 * wi, co) + p["bt"][0]
    return jnp.transpose(y, (0, 3, 1, 2))


if __name__ == "__main__":
    key = jax.random.PRNGKey(0)
    k_x, k_p = jax.random.split(key)

    N, Cin, H, W = 2, 4, 16, 16
    Cmid, Cout = 8, 4

    x = jax.random.normal(k_x, (N, Cin, H, W), jnp.float32)
    params = init_params(k_p, Cin, Cmid, Cout)
    packed = prepare_packed_params(params, H, W)   # hoisted out of the jit

    fwd = jax.jit(decoder_block_forward)
    out = jax.block_until_ready(fwd(x, packed))
    ref = jax.block_until_ready(reference_forward(x, params))

    assert out.shape == (N, Cout, 2 * (H - 4), 2 * (W - 4)), out.shape
    # bf16 intermediates (y1/y2) => compare against the f32 reference at a
    # correspondingly relaxed tolerance.
    err = float(jnp.max(jnp.abs(out - ref)))
    assert err < 5e-2, err
    print("KERNEL_OK")
</pallas_src>

<mosaic_0001>
module attributes {stable_mosaic.version = 11 : i64} {
  func.func @_conv3x3_plain_kernel(%arg0: i32, %arg1: memref<1x16x64xf32, #tpu.memory_space<vmem>>, %arg2: memref<3x64x112xf32, #tpu.memory_space<vmem>>, %arg3: memref<1x14x112xbf16, #tpu.memory_space<vmem>>, %arg4: memref<1x1x112xf32, #tpu.memory_space<vmem>>, %arg5: memref<1x1x112xf32, #tpu.memory_space<vmem>>) attributes {dimension_semantics = [#tpu.dimension_semantics<parallel>], iteration_bounds = array<i64: 2>, scalar_prefetch = 0 : i64, scratch_operands = 0 : i64, tpu.core_type = #tpu.core_type<tc>, window_params = [{transform_indices = @transform_0, window_bounds = array<i64: 1, 16, 64>}, {pipeline_mode = #tpu.pipeline_mode<synchronous>, transform_indices = @transform_1, window_bounds = array<i64: 3, 64, 112>}, {transform_indices = @transform_2, window_bounds = array<i64: 1, 14, 112>}, {transform_indices = @transform_3, window_bounds = array<i64: 1, 1, 112>}, {transform_indices = @transform_4, window_bounds = array<i64: 1, 1, 112>}]} {
    %c0 = arith.constant 0 : index
    %c0_0 = arith.constant 0 : index
    %c0_1 = arith.constant 0 : index
    %0 = vector.load %arg1[%c0, %c0_0, %c0_1] : memref<1x16x64xf32, #tpu.memory_space<vmem>>, vector<1x16x64xf32>
    %1 = vector.shape_cast %0 : vector<1x16x64xf32> to vector<16x64xf32>
    %2 = vector.extract_strided_slice %1 {offsets = [0, 0], sizes = [14, 64], strides = [1, 1]} : vector<16x64xf32> to vector<14x64xf32>
    %c0_2 = arith.constant 0 : index
    %c0_3 = arith.constant 0 : index
    %c0_4 = arith.constant 0 : index
    %3 = vector.load %arg2[%c0_2, %c0_3, %c0_4] : memref<3x64x112xf32, #tpu.memory_space<vmem>>, vector<1x64x112xf32>
    %4 = vector.shape_cast %3 : vector<1x64x112xf32> to vector<64x112xf32>
    %cst = arith.constant dense<0.000000e+00> : vector<14x112xf32>
    %5 = tpu.matmul %2, %4, %cst {dimension_numbers = #tpu.dot_dimension_numbers<[1], [0], [0], [1], [0, 0, 1, 1], [], []>} : vector<14x64xf32>, vector<64x112xf32>, vector<14x112xf32> -> vector<14x112xf32>
    %6 = vector.extract_strided_slice %1 {offsets = [1, 0], sizes = [14, 64], strides = [1, 1]} : vector<16x64xf32> to vector<14x64xf32>
    %c1 = arith.constant 1 : index
    %c0_5 = arith.constant 0 : index
    %c0_6 = arith.constant 0 : index
    %7 = vector.load %arg2[%c1, %c0_5, %c0_6] : memref<3x64x112xf32, #tpu.memory_space<vmem>>, vector<1x64x112xf32>
    %8 = vector.shape_cast %7 : vector<1x64x112xf32> to vector<64x112xf32>
    %cst_7 = arith.constant dense<0.000000e+00> : vector<14x112xf32>
    %9 = tpu.matmul %6, %8, %cst_7 {dimension_numbers = #tpu.dot_dimension_numbers<[1], [0], [0], [1], [0, 0, 1, 1], [], []>} : vector<14x64xf32>, vector<64x112xf32>, vector<14x112xf32> -> vector<14x112xf32>
    %10 = arith.addf %5, %9 : vector<14x112xf32>
    %11 = vector.extract_strided_slice %1 {offsets = [2, 0], sizes = [14, 64], strides = [1, 1]} : vector<16x64xf32> to vector<14x64xf32>
    %c2 = arith.constant 2 : index
    %c0_8 = arith.constant 0 : index
    %c0_9 = arith.constant 0 : index
    %12 = vector.load %arg2[%c2, %c0_8, %c0_9] : memref<3x64x112xf32, #tpu.memory_space<vmem>>, vector<1x64x112xf32>
    %13 = vector.shape_cast %12 : vector<1x64x112xf32> to vector<64x112xf32>
    %cst_10 = arith.constant dense<0.000000e+00> : vector<14x112xf32>
    %14 = tpu.matmul %11, %13, %cst_10 {dimension_numbers = #tpu.dot_dimension_numbers<[1], [0], [0], [1], [0, 0, 1, 1], [], []>} : vector<14x64xf32>, vector<64x112xf32>, vector<14x112xf32> -> vector<14x112xf32>
    %15 = arith.addf %10, %14 : vector<14x112xf32>
    %16 = arith.truncf %15 : vector<14x112xf32> to vector<14x112xbf16>
    %c0_11 = arith.constant 0 : index
    %c0_12 = arith.constant 0 : index
    %c0_13 = arith.constant 0 : index
    %17 = vector.load %arg3[%c0_11, %c0_12, %c0_13] : memref<1x14x112xbf16, #tpu.memory_space<vmem>>, vector<1x14x112xbf16>
    %18 = vector.shape_cast %17 : vector<1x14x112xbf16> to vector<14x112xbf16>
    %19 = vector.shape_cast %16 : vector<14x112xbf16> to vector<1x14x112xbf16>
    tpu.vector_store %arg3[%c0_11, %c0_12, %c0_13], %19 {strides = array<i32>} : memref<1x14x112xbf16, #tpu.memory_space<vmem>>, vector<1x14x112xbf16>,
    %cst_14 = arith.constant dense<0.000000e+00> : vector<112xf32>
    %20 = vector.multi_reduction <add>, %15, %cst_14 [0] : vector<14x112xf32> to vector<112xf32>
    %21 = vector.shape_cast %20 : vector<112xf32> to vector<1x112xf32>
    %c0_15 = arith.constant 0 : index
    %c0_16 = arith.constant 0 : index
    %c0_17 = arith.constant 0 : index
    %22 = vector.load %arg4[%c0_15, %c0_16, %c0_17] : memref<1x1x112xf32, #tpu.memory_space<vmem>>, vector<1x1x112xf32>
    %23 = vector.shape_cast %22 : vector<1x1x112xf32> to vector<1x112xf32>
    %24 = vector.shape_cast %21 : vector<1x112xf32> to vector<1x1x112xf32>
    tpu.vector_store %arg4[%c0_15, %c0_16, %c0_17], %24 {strides = array<i32>} : memref<1x1x112xf32, #tpu.memory_space<vmem>>, vector<1x1x112xf32>,
    %25 = arith.mulf %15, %15 : vector<14x112xf32>
    %cst_18 = arith.constant dense<0.000000e+00> : vector<112xf32>
    %26 = vector.multi_reduction <add>, %25, %cst_18 [0] : vector<14x112xf32> to vector<112xf32>
    %27 = vector.shape_cast %26 : vector<112xf32> to vector<1x112xf32>
    %c0_19 = arith.constant 0 : index
    %c0_20 = arith.constant 0 : index
    %c0_21 = arith.constant 0 : index
    %28 = vector.load %arg5[%c0_19, %c0_20, %c0_21] : memref<1x1x112xf32, #tpu.memory_space<vmem>>, vector<1x1x112xf32>
    %29 = vector.shape_cast %28 : vector<1x1x112xf32> to vector<1x112xf32>
    %30 = vector.shape_cast %27 : vector<1x112xf32> to vector<1x1x112xf32>
    tpu.vector_store %arg5[%c0_19, %c0_20, %c0_21], %30 {strides = array<i32>} : memref<1x1x112xf32, #tpu.memory_space<vmem>>, vector<1x1x112xf32>,
    return
  }
  func.func @transform_0(%arg0: i32) -> (i32, i32, i32) {
    %c0_i32 = arith.constant 0 : i32
    %c0_i32_0 = arith.constant 0 : i32
    %c0_i32_1 = arith.constant 0 : i32
    return %arg0, %c0_i32, %c0_i32_0 : i32, i32, i32
  }
  func.func @transform_1(%arg0: i32) -> (i32, i32, i32) {
    %c0_i32 = arith.constant 0 : i32
    %c0_i32_0 = arith.constant 0 : i32
    %c0_i32_1 = arith.constant 0 : i32
    %c0_i32_2 = arith.constant 0 : i32
    return %c0_i32, %c0_i32_0, %c0_i32_1 : i32, i32, i32
  }
  func.func @transform_2(%arg0: i32) -> (i32, i32, i32) {
    %c0_i32 = arith.constant 0 : i32
    %c0_i32_0 = arith.constant 0 : i32
    %c0_i32_1 = arith.constant 0 : i32
    return %arg0, %c0_i32, %c0_i32_0 : i32, i32, i32
  }
  func.func @transform_3(%arg0: i32) -> (i32, i32, i32) {
    %c0_i32 = arith.constant 0 : i32
    %c0_i32_0 = arith.constant 0 : i32
    %c0_i32_1 = arith.constant 0 : i32
    return %arg0, %c0_i32, %c0_i32_0 : i32, i32, i32
  }
  func.func @transform_4(%arg0: i32) -> (i32, i32, i32) {
    %c0_i32 = arith.constant 0 : i32
    %c0_i32_0 = arith.constant 0 : i32
    %c0_i32_1 = arith.constant 0 : i32
    return %arg0, %c0_i32, %c0_i32_0 : i32, i32, i32
  }
}

module attributes {stable_mosaic.version = 11 : i64} {
  func.func @_conv3x3_bn_kernel(%arg0: i32, %arg1: memref<1x14x112xbf16, #tpu.memory_space<vmem>>, %arg2: memref<3x112x96xf32, #tpu.memory_space<vmem>>, %arg3: memref<1x112xf32, #tpu.memory_space<vmem>>, %arg4: memref<1x112xf32, #tpu.memory_space<vmem>>, %arg5: memref<1x12x96xbf16, #tpu.memory_space<vmem>>, %arg6: memref<1x1x96xf32, #tpu.memory_space<vmem>>, %arg7: memref<1x1x96xf32, #tpu.memory_space<vmem>>) attributes {dimension_semantics = [#tpu.dimension_semantics<parallel>], iteration_bounds = array<i64: 2>, scalar_prefetch = 0 : i64, scratch_operands = 0 : i64, tpu.core_type = #tpu.core_type<tc>, window_params = [{transform_indices = @transform_0, window_bounds = array<i64: 1, 14, 112>}, {pipeline_mode = #tpu.pipeline_mode<synchronous>, transform_indices = @transform_1, window_bounds = array<i64: 3, 112, 96>}, {pipeline_mode = #tpu.pipeline_mode<synchronous>, transform_indices = @transform_2, window_bounds = array<i64: 1, 112>}, {pipeline_mode = #tpu.pipeline_mode<synchronous>, transform_indices = @transform_3, window_bounds = array<i64: 1, 112>}, {transform_indices = @transform_4, window_bounds = array<i64: 1, 12, 96>}, {transform_indices = @transform_5, window_bounds = array<i64: 1, 1, 96>}, {transform_indices = @transform_6, window_bounds = array<i64: 1, 1, 96>}]} {
    %c0 = arith.constant 0 : index
    %c0_0 = arith.constant 0 : index
    %c0_1 = arith.constant 0 : index
    %0 = vector.load %arg1[%c0, %c0_0, %c0_1] : memref<1x14x112xbf16, #tpu.memory_space<vmem>>, vector<1x14x112xbf16>
    %1 = vector.shape_cast %0 : vector<1x14x112xbf16> to vector<14x112xbf16>
    %2 = arith.extf %1 : vector<14x112xbf16> to vector<14x112xf32>
    %c0_2 = arith.constant 0 : index
    %c0_3 = arith.constant 0 : index
    %3 = vector.load %arg3[%c0_2, %c0_3] : memref<1x112xf32, #tpu.memory_space<vmem>>, vector<1x112xf32>
    %4 = vector.shape_cast %3 : vector<1x112xf32> to vector<112xf32>
    %5 = vector.shape_cast %4 : vector<112xf32> to vector<1x112xf32>
    %6 = vector.broadcast %5 : vector<1x112xf32> to vector<14x112xf32>
    %7 = arith.mulf %2, %6 : vector<14x112xf32>
    %c0_4 = arith.constant 0 : index
    %c0_5 = arith.constant 0 : index
    %8 = vector.load %arg4[%c0_4, %c0_5] : memref<1x112xf32, #tpu.memory_space<vmem>>, vector<1x112xf32>
    %9 = vector.shape_cast %8 : vector<1x112xf32> to vector<112xf32>
    %10 = vector.shape_cast %9 : vector<112xf32> to vector<1x112xf32>
    %11 = vector.broadcast %10 : vector<1x112xf32> to vector<14x112xf32>
    %12 = arith.addf %7, %11 : vector<14x112xf32>
    %cst = arith.constant 0.000000e+00 : f32
    %13 = vector.broadcast %cst : f32 to vector<14x112xf32>
    %14 = arith.maximumf %12, %13 : vector<14x112xf32>
    %15 = vector.extract_strided_slice %14 {offsets = [0, 0], sizes = [12, 112], strides = [1, 1]} : vector<14x112xf32> to vector<12x112xf32>
    %c0_6 = arith.constant 0 : index
    %c0_7 = arith.constant 0 : index
    %c0_8 = arith.constant 0 : index
    %16 = vector.load %arg2[%c0_6, %c0_7, %c0_8] : memref<3x112x96xf32, #tpu.memory_space<vmem>>, vector<1x112x96xf32>
    %17 = vector.shape_cast %16 : vector<1x112x96xf32> to vector<112x96xf32>
    %cst_9 = arith.constant dense<0.000000e+00> : vector<12x96xf32>
    %18 = tpu.matmul %15, %17, %cst_9 {dimension_numbers = #tpu.dot_dimension_numbers<[1], [0], [0], [1], [0, 0, 1, 1], [], []>} : vector<12x112xf32>, vector<112x96xf32>, vector<12x96xf32> -> vector<12x96xf32>
    %19 = vector.extract_strided_slice %14 {offsets = [1, 0], sizes = [12, 112], strides = [1, 1]} : vector<14x112xf32> to vector<12x112xf32>
    %c1 = arith.constant 1 : index
    %c0_10 = arith.constant 0 : index
    %c0_11 = arith.constant 0 : index
    %20 = vector.load %arg2[%c1, %c0_10, %c0_11] : memref<3x112x96xf32, #tpu.memory_space<vmem>>, vector<1x112x96xf32>
    %21 = vector.shape_cast %20 : vector<1x112x96xf32> to vector<112x96xf32>
    %cst_12 = arith.constant dense<0.000000e+00> : vector<12x96xf32>
    %22 = tpu.matmul %19, %21, %cst_12 {dimension_numbers = #tpu.dot_dimension_numbers<[1], [0], [0], [1], [0, 0, 1, 1], [], []>} : vector<12x112xf32>, vector<112x96xf32>, vector<12x96xf32> -> vector<12x96xf32>
    %23 = arith.addf %18, %22 : vector<12x96xf32>
    %24 = vector.extract_strided_slice %14 {offsets = [2, 0], sizes = [12, 112], strides = [1, 1]} : vector<14x112xf32> to vector<12x112xf32>
    %c2 = arith.constant 2 : index
    %c0_13 = arith.constant 0 : index
    %c0_14 = arith.constant 0 : index
    %25 = vector.load %arg2[%c2, %c0_13, %c0_14] : memref<3x112x96xf32, #tpu.memory_space<vmem>>, vector<1x112x96xf32>
    %26 = vector.shape_cast %25 : vector<1x112x96xf32> to vector<112x96xf32>
    %cst_15 = arith.constant dense<0.000000e+00> : vector<12x96xf32>
    %27 = tpu.matmul %24, %26, %cst_15 {dimension_numbers = #tpu.dot_dimension_numbers<[1], [0], [0], [1], [0, 0, 1, 1], [], []>} : vector<12x112xf32>, vector<112x96xf32>, vector<12x96xf32> -> vector<12x96xf32>
    %28 = arith.addf %23, %27 : vector<12x96xf32>
    %29 = arith.truncf %28 : vector<12x96xf32> to vector<12x96xbf16>
    %c0_16 = arith.constant 0 : index
    %c0_17 = arith.constant 0 : index
    %c0_18 = arith.constant 0 : index
    %30 = vector.load %arg5[%c0_16, %c0_17, %c0_18] : memref<1x12x96xbf16, #tpu.memory_space<vmem>>, vector<1x12x96xbf16>
    %31 = vector.shape_cast %30 : vector<1x12x96xbf16> to vector<12x96xbf16>
    %32 = vector.shape_cast %29 : vector<12x96xbf16> to vector<1x12x96xbf16>
    tpu.vector_store %arg5[%c0_16, %c0_17, %c0_18], %32 {strides = array<i32>} : memref<1x12x96xbf16, #tpu.memory_space<vmem>>, vector<1x12x96xbf16>,
    %cst_19 = arith.constant dense<0.000000e+00> : vector<96xf32>
    %33 = vector.multi_reduction <add>, %28, %cst_19 [0] : vector<12x96xf32> to vector<96xf32>
    %34 = vector.shape_cast %33 : vector<96xf32> to vector<1x96xf32>
    %c0_20 = arith.constant 0 : index
    %c0_21 = arith.constant 0 : index
    %c0_22 = arith.constant 0 : index
    %35 = vector.load %arg6[%c0_20, %c0_21, %c0_22] : memref<1x1x96xf32, #tpu.memory_space<vmem>>, vector<1x1x96xf32>
    %36 = vector.shape_cast %35 : vector<1x1x96xf32> to vector<1x96xf32>
    %37 = vector.shape_cast %34 : vector<1x96xf32> to vector<1x1x96xf32>
    tpu.vector_store %arg6[%c0_20, %c0_21, %c0_22], %37 {strides = array<i32>} : memref<1x1x96xf32, #tpu.memory_space<vmem>>, vector<1x1x96xf32>,
    %38 = arith.mulf %28, %28 : vector<12x96xf32>
    %cst_23 = arith.constant dense<0.000000e+00> : vector<96xf32>
    %39 = vector.multi_reduction <add>, %38, %cst_23 [0] : vector<12x96xf32> to vector<96xf32>
    %40 = vector.shape_cast %39 : vector<96xf32> to vector<1x96xf32>
    %c0_24 = arith.constant 0 : index
    %c0_25 = arith.constant 0 : index
    %c0_26 = arith.constant 0 : index
    %41 = vector.load %arg7[%c0_24, %c0_25, %c0_26] : memref<1x1x96xf32, #tpu.memory_space<vmem>>, vector<1x1x96xf32>
    %42 = vector.shape_cast %41 : vector<1x1x96xf32> to vector<1x96xf32>
    %43 = vector.shape_cast %40 : vector<1x96xf32> to vector<1x1x96xf32>
    tpu.vector_store %arg7[%c0_24, %c0_25, %c0_26], %43 {strides = array<i32>} : memref<1x1x96xf32, #tpu.memory_space<vmem>>, vector<1x1x96xf32>,
    return
  }
  func.func @transform_0(%arg0: i32) -> (i32, i32, i32) {
    %c0_i32 = arith.constant 0 : i32
    %c0_i32_0 = arith.constant 0 : i32
    %c0_i32_1 = arith.constant 0 : i32
    return %arg0, %c0_i32, %c0_i32_0 : i32, i32, i32
  }
  func.func @transform_1(%arg0: i32) -> (i32, i32, i32) {
    %c0_i32 = arith.constant 0 : i32
    %c0_i32_0 = arith.constant 0 : i32
    %c0_i32_1 = arith.constant 0 : i32
    %c0_i32_2 = arith.constant 0 : i32
    return %c0_i32, %c0_i32_0, %c0_i32_1 : i32, i32, i32
  }
  func.func @transform_2(%arg0: i32) -> (i32, i32) {
    %c0_i32 = arith.constant 0 : i32
    %c0_i32_0 = arith.constant 0 : i32
    %c0_i32_1 = arith.constant 0 : i32
    return %c0_i32, %c0_i32_0 : i32, i32
  }
  func.func @transform_3(%arg0: i32) -> (i32, i32) {
    %c0_i32 = arith.constant 0 : i32
    %c0_i32_0 = arith.constant 0 : i32
    %c0_i32_1 = arith.constant 0 : i32
    return %c0_i32, %c0_i32_0 : i32, i32
  }
  func.func @transform_4(%arg0: i32) -> (i32, i32, i32) {
    %c0_i32 = arith.constant 0 : i32
    %c0_i32_0 = arith.constant 0 : i32
    %c0_i32_1 = arith.constant 0 : i32
    return %arg0, %c0_i32, %c0_i32_0 : i32, i32, i32
  }
  func.func @transform_5(%arg0: i32) -> (i32, i32, i32) {
    %c0_i32 = arith.constant 0 : i32
    %c0_i32_0 = arith.constant 0 : i32
    %c0_i32_1 = arith.constant 0 : i32
    return %arg0, %c0_i32, %c0_i32_0 : i32, i32, i32
  }
  func.func @transform_6(%arg0: i32) -> (i32, i32, i32) {
    %c0_i32 = arith.constant 0 : i32
    %c0_i32_0 = arith.constant 0 : i32
    %c0_i32_1 = arith.constant 0 : i32
    return %arg0, %c0_i32, %c0_i32_0 : i32, i32, i32
  }
}

module attributes {stable_mosaic.version = 11 : i64} {
  func.func @_deconv2x2_kernel(%arg0: i32, %arg1: memref<1x12x96xbf16, #tpu.memory_space<vmem>>, %arg2: memref<96x192xf32, #tpu.memory_space<vmem>>, %arg3: memref<1x192xf32, #tpu.memory_space<vmem>>, %arg4: memref<1x96xf32, #tpu.memory_space<vmem>>, %arg5: memref<1x96xf32, #tpu.memory_space<vmem>>, %arg6: memref<1x12x192xf32, #tpu.memory_space<vmem>>) attributes {dimension_semantics = [#tpu.dimension_semantics<parallel>], iteration_bounds = array<i64: 2>, scalar_prefetch = 0 : i64, scratch_operands = 0 : i64, tpu.core_type = #tpu.core_type<tc>, window_params = [{transform_indices = @transform_0, window_bounds = array<i64: 1, 12, 96>}, {pipeline_mode = #tpu.pipeline_mode<synchronous>, transform_indices = @transform_1, window_bounds = array<i64: 96, 192>}, {pipeline_mode = #tpu.pipeline_mode<synchronous>, transform_indices = @transform_2, window_bounds = array<i64: 1, 192>}, {pipeline_mode = #tpu.pipeline_mode<synchronous>, transform_indices = @transform_3, window_bounds = array<i64: 1, 96>}, {pipeline_mode = #tpu.pipeline_mode<synchronous>, transform_indices = @transform_4, window_bounds = array<i64: 1, 96>}, {transform_indices = @transform_5, window_bounds = array<i64: 1, 12, 192>}]} {
    %c0 = arith.constant 0 : index
    %c0_0 = arith.constant 0 : index
    %c0_1 = arith.constant 0 : index
    %0 = vector.load %arg1[%c0, %c0_0, %c0_1] : memref<1x12x96xbf16, #tpu.memory_space<vmem>>, vector<1x12x96xbf16>
    %1 = vector.shape_cast %0 : vector<1x12x96xbf16> to vector<12x96xbf16>
    %2 = arith.extf %1 : vector<12x96xbf16> to vector<12x96xf32>
    %c0_2 = arith.constant 0 : index
    %c0_3 = arith.constant 0 : index
    %3 = vector.load %arg4[%c0_2, %c0_3] : memref<1x96xf32, #tpu.memory_space<vmem>>, vector<1x96xf32>
    %4 = vector.shape_cast %3 : vector<1x96xf32> to vector<96xf32>
    %5 = vector.shape_cast %4 : vector<96xf32> to vector<1x96xf32>
    %6 = vector.broadcast %5 : vector<1x96xf32> to vector<12x96xf32>
    %7 = arith.mulf %2, %6 : vector<12x96xf32>
    %c0_4 = arith.constant 0 : index
    %c0_5 = arith.constant 0 : index
    %8 = vector.load %arg5[%c0_4, %c0_5] : memref<1x96xf32, #tpu.memory_space<vmem>>, vector<1x96xf32>
    %9 = vector.shape_cast %8 : vector<1x96xf32> to vector<96xf32>
    %10 = vector.shape_cast %9 : vector<96xf32> to vector<1x96xf32>
    %11 = vector.broadcast %10 : vector<1x96xf32> to vector<12x96xf32>
    %12 = arith.addf %7, %11 : vector<12x96xf32>
    %cst = arith.constant 0.000000e+00 : f32
    %13 = vector.broadcast %cst : f32 to vector<12x96xf32>
    %14 = arith.maximumf %12, %13 : vector<12x96xf32>
    %c0_6 = arith.constant 0 : index
    %c0_7 = arith.constant 0 : index
    %15 = vector.load %arg2[%c0_6, %c0_7] : memref<96x192xf32, #tpu.memory_space<vmem>>, vector<96x192xf32>
    %cst_8 = arith.constant dense<0.000000e+00> : vector<12x192xf32>
    %16 = tpu.matmul %14, %15, %cst_8 {dimension_numbers = #tpu.dot_dimension_numbers<[1], [0], [0], [1], [0, 0, 1, 1], [], []>} : vector<12x96xf32>, vector<96x192xf32>, vector<12x192xf32> -> vector<12x192xf32>
    %c0_9 = arith.constant 0 : index
    %c0_10 = arith.constant 0 : index
    %17 = vector.load %arg3[%c0_9, %c0_10] : memref<1x192xf32, #tpu.memory_space<vmem>>, vector<1x192xf32>
    %18 = vector.shape_cast %17 : vector<1x192xf32> to vector<192xf32>
    %19 = vector.shape_cast %18 : vector<192xf32> to vector<1x192xf32>
    %20 = vector.broadcast %19 : vector<1x192xf32> to vector<12x192xf32>
    %21 = arith.addf %16, %20 : vector<12x192xf32>
    %c0_11 = arith.constant 0 : index
    %c0_12 = arith.constant 0 : index
    %c0_13 = arith.constant 0 : index
    %22 = vector.load %arg6[%c0_11, %c0_12, %c0_13] : memref<1x12x192xf32, #tpu.memory_space<vmem>>, vector<1x12x192xf32>
    %23 = vector.shape_cast %22 : vector<1x12x192xf32> to vector<12x192xf32>
    %24 = vector.shape_cast %21 : vector<12x192xf32> to vector<1x12x192xf32>
    tpu.vector_store %arg6[%c0_11, %c0_12, %c0_13], %24 {strides = array<i32>} : memref<1x12x192xf32, #tpu.memory_space<vmem>>, vector<1x12x192xf32>,
    return
  }
  func.func @transform_0(%arg0: i32) -> (i32, i32, i32) {
    %c0_i32 = arith.constant 0 : i32
    %c0_i32_0 = arith.constant 0 : i32
    %c0_i32_1 = arith.constant 0 : i32
    return %arg0, %c0_i32, %c0_i32_0 : i32, i32, i32
  }
  func.func @transform_1(%arg0: i32) -> (i32, i32) {
    %c0_i32 = arith.constant 0 : i32
    %c0_i32_0 = arith.constant 0 : i32
    %c0_i32_1 = arith.constant 0 : i32
    return %c0_i32, %c0_i32_0 : i32, i32
  }
  func.func @transform_2(%arg0: i32) -> (i32, i32) {
    %c0_i32 = arith.constant 0 : i32
    %c0_i32_0 = arith.constant 0 : i32
    %c0_i32_1 = arith.constant 0 : i32
    return %c0_i32, %c0_i32_0 : i32, i32
  }
  func.func @transform_3(%arg0: i32) -> (i32, i32) {
    %c0_i32 = arith.constant 0 : i32
    %c0_i32_0 = arith.constant 0 : i32
    %c0_i32_1 = arith.constant 0 : i32
    return %c0_i32, %c0_i32_0 : i32, i32
  }
  func.func @transform_4(%arg0: i32) -> (i32, i32) {
    %c0_i32 = arith.constant 0 : i32
    %c0_i32_0 = arith.constant 0 : i32
    %c0_i32_1 = arith.constant 0 : i32
    return %c0_i32, %c0_i32_0 : i32, i32
  }
  func.func @transform_5(%arg0: i32) -> (i32, i32, i32) {
    %c0_i32 = arith.constant 0 : i32
    %c0_i32_0 = arith.constant 0 : i32
    %c0_i32_1 = arith.constant 0 : i32
    return %arg0, %c0_i32, %c0_i32_0 : i32, i32, i32
  }
}

</mosaic_0001>

<llo_original>
// kernel: decoder_block_forward.4
$region0: #{decoder_block_forward.4}
  #allocation0 [shape = 'u32[]', space=smem, size = 0x4, offset = 0x4, fixed_abs, tag = 'smem constant byte address 0x4 - core index']
  #allocation1 [shape = 'u32[144,128]{1,0:T(1,128)}', space=vmem, size = 0x12000, scoped, tag = 'internal scratch']
  %s0 = inlined_call_operand.vmem [shape: bf16[2,14,112], index: 0, kind: input, shape index: {}]
  %s1 = inlined_call_operand.vmem [shape: f32[3,112,96], index: 1, kind: input, shape index: {}]
  %s2 = inlined_call_operand.vmem [shape: f32[1,112], index: 2, kind: input, shape index: {}]
  %s3 = inlined_call_operand.vmem [shape: f32[1,112], index: 3, kind: input, shape index: {}]
  %s4 = inlined_call_operand.vmem [shape: bf16[2,12,96], index: 4, kind: output, shape index: {0}]
  %s5 = inlined_call_operand.vmem [shape: f32[2,1,96], index: 5, kind: output, shape index: {1}]
  %s6 = inlined_call_operand.vmem [shape: f32[2,1,96], index: 6, kind: output, shape index: {2}]
  %7 = xla_tuple %s4, %s5, %s6
  %s8 = sld [smem:[#allocation0]]
  $region65: #{decoder_block_forward.4} parent=0
    _
  %s10 = ssub.s32 1, %s8
  %s11 = scalar_select 0, %s10, %s8
  loop: start=0, step=1, limit=4
  $region2: #{decoder_block_forward.4} parent=0 // loop_pre_header
    _
  $region3: #{decoder_block_forward.4} parent=0 // loop_header
    %s13 = sphi 0, %s17
    %p14 = scmp.ge.s32.totalorder %s13, 4
    %s23 = sphi 0, %s25
    %s26 = sphi 0, %s23
    %s27 = sphi 0, %s26
    %s43 = sphi 0, %s27
    %s47 = sphi 0, %s47
    %s49 = sphi 0, %s47
    %s50 = sphi 0, %s49
    %s64 = sphi 0, %s50
    %s68 = sphi 0, %s68
    %s70 = sphi 0, %s68
    %s71 = sphi 0, %s70
    %s85 = sphi 0, %s71
    %s89 = sphi 0, %s89
    %s91 = sphi 0, %s89
    %s92 = sphi 0, %s91
    %s106 = sphi 0, %s92
    %s112 = sphi 0, %s114
    %s115 = sphi 0, %s112
    %s116 = sphi 0, %s115
    %s132 = sphi 0, %s116
    %s138 = sphi 0, %s140
    %s141 = sphi 0, %s138
    %s142 = sphi 0, %s141
    %s158 = sphi 0, %s142
    %s164 = sphi 0, %s166
    %s167 = sphi 0, %s164
    %s168 = sphi 0, %s167
    %s184 = sphi 0, %s168
  $region4: #{decoder_block_forward.4} parent=0 // loop_header_branch
    %16 = sbr.rel (%p14) target = $region8
  $region5: #{decoder_block_forward.4} parent=0 // loop_body
    %s18 = ssub.s32 %s13, 1
    %s19 = ssub.s32 %s13, 2
    %s20 = sadd.s32 %s13, 1
    %s21 = ssub.s32 %s13, %s20
    %p22 = scmp.eq.s32.totalorder %s21, 0
    %s24 = sadd.s32 %s23, 1
    %s25 = scalar_select %p22, %s23, %s24
    %p28 = pneg %p22
    %p29 = scmp.eq.s32.totalorder %s13, 1
    %p30 = por %p28, %p29
    %p31 = scmp.ne.s32.totalorder %s23, %s26
    %p32 = scmp.eq.s32.totalorder %s13, 0
    %p33 = por %p31, %p32
    %p34 = scmp.ne.s32.totalorder %s23, %s26
    %p35 = scmp.eq.s32.totalorder %s18, 1
    %p36 = por %p34, %p35
    %p37 = scmp.ne.s32.totalorder %s26, %s27
    %p38 = scmp.eq.s32.totalorder %s18, 0
    %p39 = por %p37, %p38
    %p40 = scmp.ne.s32.totalorder %s26, %s27
    %p41 = scmp.eq.s32.totalorder %s19, 1
    %p42 = por %p40, %p41
    %p44 = scmp.ne.s32.totalorder %s27, %s43
    %p45 = scmp.eq.s32.totalorder %s19, 0
    %p46 = por %p44, %p45
    %s48 = sadd.s32 %s47, 1
    %p51 = scmp.eq.s32.totalorder %s13, 1
    %p52 = scmp.ne.s32.totalorder %s47, %s49
    %p53 = scmp.eq.s32.totalorder %s13, 0
    %p54 = por %p52, %p53
    %p55 = scmp.ne.s32.totalorder %s47, %s49
    %p56 = scmp.eq.s32.totalorder %s18, 1
    %p57 = por %p55, %p56
    %p58 = scmp.ne.s32.totalorder %s49, %s50
    %p59 = scmp.eq.s32.totalorder %s18, 0
    %p60 = por %p58, %p59
    %p61 = scmp.ne.s32.totalorder %s49, %s50
    %p62 = scmp.eq.s32.totalorder %s19, 1
    %p63 = por %p61, %p62
    %p65 = scmp.ne.s32.totalorder %s50, %s64
    %p66 = scmp.eq.s32.totalorder %s19, 0
    %p67 = por %p65, %p66
    %s69 = sadd.s32 %s68, 1
    %p72 = scmp.eq.s32.totalorder %s13, 1
    %p73 = scmp.ne.s32.totalorder %s68, %s70
    %p74 = scmp.eq.s32.totalorder %s13, 0
    %p75 = por %p73, %p74
    %p76 = scmp.ne.s32.totalorder %s68, %s70
    %p77 = scmp.eq.s32.totalorder %s18, 1
    %p78 = por %p76, %p77
    %p79 = scmp.ne.s32.totalorder %s70, %s71
    %p80 = scmp.eq.s32.totalorder %s18, 0
    %p81 = por %p79, %p80
    %p82 = scmp.ne.s32.totalorder %s70, %s71
    %p83 = scmp.eq.s32.totalorder %s19, 1
    %p84 = por %p82, %p83
    %p86 = scmp.ne.s32.totalorder %s71, %s85
    %p87 = scmp.eq.s32.totalorder %s19, 0
    %p88 = por %p86, %p87
    %s90 = sadd.s32 %s89, 1
    %p93 = scmp.eq.s32.totalorder %s13, 1
    %p94 = scmp.ne.s32.totalorder %s89, %s91
    %p95 = scmp.eq.s32.totalorder %s13, 0
    %p96 = por %p94, %p95
    %p97 = scmp.ne.s32.totalorder %s89, %s91
    %p98 = scmp.eq.s32.totalorder %s18, 1
    %p99 = por %p97, %p98
    %p100 = scmp.ne.s32.totalorder %s91, %s92
    %p101 = scmp.eq.s32.totalorder %s18, 0
    %p102 = por %p100, %p101
    %p103 = scmp.ne.s32.totalorder %s91, %s92
    %p104 = scmp.eq.s32.totalorder %s19, 1
    %p105 = por %p103, %p104
    %p107 = scmp.ne.s32.totalorder %s92, %s106
    %p108 = scmp.eq.s32.totalorder %s19, 0
    %p109 = por %p107, %p108
    %s110 = ssub.s32 %s13, %s20
    %p111 = scmp.eq.s32.totalorder %s110, 0
    %s113 = sadd.s32 %s112, 1
    %s114 = scalar_select %p111, %s112, %s113
    %p117 = pneg %p111
    %p118 = scmp.eq.s32.totalorder %s13, 1
    %p119 = por %p117, %p118
    %p120 = scmp.ne.s32.totalorder %s112, %s115
    %p121 = scmp.eq.s32.totalorder %s13, 0
    %p122 = por %p120, %p121
    %p123 = scmp.ne.s32.totalorder %s112, %s115
    %p124 = scmp.eq.s32.totalorder %s18, 1
    %p125 = por %p123, %p124
    %p126 = scmp.ne.s32.totalorder %s115, %s116
    %p127 = scmp.eq.s32.totalorder %s18, 0
    %p128 = por %p126, %p127
    %p129 = scmp.ne.s32.totalorder %s115, %s116
    %p130 = scmp.eq.s32.totalorder %s19, 1
    %p131 = por %p129, %p130
    %p133 = scmp.ne.s32.totalorder %s116, %s132
    %p134 = scmp.eq.s32.totalorder %s19, 0
    %p135 = por %p133, %p134
    %s136 = ssub.s32 %s13, %s20
    %p137 = scmp.eq.s32.totalorder %s136, 0
    %s139 = sadd.s32 %s138, 1
    %s140 = scalar_select %p137, %s138, %s139
    %p143 = pneg %p137
    %p144 = scmp.eq.s32.totalorder %s13, 1
    %p145 = por %p143, %p144
    %p146 = scmp.ne.s32.totalorder %s138, %s141
    %p147 = scmp.eq.s32.totalorder %s13, 0
    %p148 = por %p146, %p147
    %p149 = scmp.ne.s32.totalorder %s138, %s141
    %p150 = scmp.eq.s32.totalorder %s18, 1
    %p151 = por %p149, %p150
    %p152 = scmp.ne.s32.totalorder %s141, %s142
    %p153 = scmp.eq.s32.totalorder %s18, 0
    %p154 = por %p152, %p153
    %p155 = scmp.ne.s32.totalorder %s141, %s142
    %p156 = scmp.eq.s32.totalorder %s19, 1
    %p157 = por %p155, %p156
    %p159 = scmp.ne.s32.totalorder %s142, %s158
    %p160 = scmp.eq.s32.totalorder %s19, 0
    %p161 = por %p159, %p160
    %s162 = ssub.s32 %s13, %s20
    %p163 = scmp.eq.s32.totalorder %s162, 0
    %s165 = sadd.s32 %s164, 1
    %s166 = scalar_select %p163, %s164, %s165
    %p169 = pneg %p163
    %p170 = scmp.eq.s32.totalorder %s13, 1
    %p171 = por %p169, %p170
    %p172 = scmp.ne.s32.totalorder %s164, %s167
    %p173 = scmp.eq.s32.totalorder %s13, 0
    %p174 = por %p172, %p173
    %p175 = scmp.ne.s32.totalorder %s164, %s167
    %p176 = scmp.eq.s32.totalorder %s18, 1
    %p177 = por %p175, %p176
    %p178 = scmp.ne.s32.totalorder %s167, %s168
    %p179 = scmp.eq.s32.totalorder %s18, 0
    %p180 = por %p178, %p179
    %p181 = scmp.ne.s32.totalorder %s167, %s168
    %p182 = scmp.eq.s32.totalorder %s19, 1
    %p183 = por %p181, %p182
    %p185 = scmp.ne.s32.totalorder %s168, %s184
    %p186 = scmp.eq.s32.totalorder %s19, 0
    %p187 = por %p185, %p186
    %p188 = scmp.le.s32.totalorder 1, %s13
    %p189 = scmp.lt.s32.totalorder %s13, 3
    %p190 = pnand %p188, %p189
    %p191 = pneg %p190
    // Predicated region
    $region9: #{decoder_block_forward.4} parent=5 // pred_check
      _
    $region10: #{decoder_block_forward.4} parent=5 // pred_check_branch
      %193 = sbr.rel (%p190) target = $region12
    $region11: #{decoder_block_forward.4} parent=5 // pred_region
      %s194 = ssub.s32 %s13, 1
      // Predicated region
      $region13: #{decoder_block_forward.4} parent=11 // pred_check
        %p195 = pneg %p60
      $region14: #{decoder_block_forward.4} parent=11 // pred_check_branch
        %197 = sbr.rel (%p195) target = $region16
      $region15: #{decoder_block_forward.4} parent=11 // pred_region
        _
      $region16: #{decoder_block_forward.4} parent=11 // pred_fallthru
        _
      // Predicated region
      $region17: #{decoder_block_forward.4} parent=11 // pred_check
        %p198 = pneg %p81
      $region18: #{decoder_block_forward.4} parent=11 // pred_check_branch
        %200 = sbr.rel (%p198) target = $region20
      $region19: #{decoder_block_forward.4} parent=11 // pred_region
        _
      $region20: #{decoder_block_forward.4} parent=11 // pred_fallthru
        _
      // Predicated region
      $region21: #{decoder_block_forward.4} parent=11 // pred_check
        %p201 = pneg %p102
      $region22: #{decoder_block_forward.4} parent=11 // pred_check_branch
        %203 = sbr.rel (%p201) target = $region24
      $region23: #{decoder_block_forward.4} parent=11 // pred_region
        _
      $region24: #{decoder_block_forward.4} parent=11 // pred_fallthru
        _
    $region12: #{decoder_block_forward.4} parent=5 // pred_fallthru
      _
    %p204 = scmp.lt.s32.totalorder %s13, 2
    // Predicated region
    $region25: #{decoder_block_forward.4} parent=5 // pred_check
      %p205 = pneg %p204
    $region26: #{decoder_block_forward.4} parent=5 // pred_check_branch
      %207 = sbr.rel (%p205) target = $region28
    $region27: #{decoder_block_forward.4} parent=5 // pred_region
      // Predicated region
      $region29: #{decoder_block_forward.4} parent=27 // pred_check
        %p208 = pneg %p33
      $region30: #{decoder_block_forward.4} parent=27 // pred_check_branch
        %210 = sbr.rel (%p208) target = $region32
      $region31: #{decoder_block_forward.4} parent=27 // pred_region
        %p211 = scmp.lt.s32.totalorder %s13, 1
        %s212 = scalar_select %p211, %s13, 1
        %s213 = smul.addr %s212, 2
        %s214 = smul.addr %s213, 4
        %s215 = scalar_lea.vmem %s0, %s214
      $region32: #{decoder_block_forward.4} parent=27 // pred_fallthru
        _
    $region28: #{decoder_block_forward.4} parent=5 // pred_fallthru
      _
    %p216 = scmp.le.s32.totalorder 1, %s13
    %p217 = scmp.lt.s32.totalorder %s13, 3
    %p218 = pnand %p216, %p217
    %p219 = pneg %p218
    // Predicated region
    $region33: #{decoder_block_forward.4} parent=5 // pred_check
      _
    $region34: #{decoder_block_forward.4} parent=5 // pred_check_branch
      %221 = sbr.rel (%p218) target = $region36
    $region35: #{decoder_block_forward.4} parent=5 // pred_region
      %s222 = ssub.s32 %s13, 1
      %p223 = scmp.lt.s32.totalorder %s18, 1
      %s224 = scalar_select %p223, %s18, 1
      %s225 = smul.addr %s224, 2
      %s226 = smul.addr %s225, 4
      %s227 = scalar_lea.vmem %s0, %s226
      %p228 = pneg %p39
      %p229 = pneg %p36
      %p230 = pneg %p60
      %p231 = pneg %p57
      %p232 = pneg %p81
      %p233 = pneg %p78
      %p234 = pneg %p102
      %p235 = pneg %p99
      %p236 = pneg %p128
      %p237 = pneg %p125
      %p238 = scmp.lt.s32.totalorder %s18, 1
      %s239 = scalar_select %p238, %s18, 1
      %s240 = smul.addr %s239, 2
      %s241 = smul.addr %s240, 4
      %s242 = scalar_lea.vmem %s4, %s241
      %p243 = pneg %p154
      %p244 = pneg %p151
      %p245 = scmp.lt.s32.totalorder %s18, 1
      %s246 = scalar_select %p245, %s18, 1
      %s247 = scalar_lea.vmem %s5, %s246
      %p248 = pneg %p180
      %p249 = pneg %p177
      %p250 = scmp.lt.s32.totalorder %s18, 1
      %s251 = scalar_select %p250, %s18, 1
      %s252 = scalar_lea.vmem %s6, %s251
      %p253 = scmp.lt.s32.totalorder %s18, 1
      %s254 = scalar_select %p253, %s18, 1
      %s255 = smul.addr %s254, 2
      %s256 = smul.addr %s255, 4
      %s257 = scalar_lea.vmem %s0, %s256
      %p258 = scmp.lt.s32.totalorder %s18, 1
      %s259 = scalar_select %p258, %s18, 1
      %s260 = smul.addr %s259, 2
      %s261 = smul.addr %s260, 4
      %s262 = scalar_lea.vmem %s4, %s261
      %p263 = scmp.lt.s32.totalorder %s18, 1
      %s264 = scalar_select %p263, %s18, 1
      %s265 = scalar_lea.vmem %s5, %s264
      %p266 = scmp.lt.s32.totalorder %s18, 1
      %s267 = scalar_select %p266, %s18, 1
      %s268 = scalar_lea.vmem %s6, %s267
      %v269 = vld [vmem:[%s257] sm:$0xf]
      %v270 = vld [vmem:[%s257 + $0x4] sm:$0x7]
      %v271 = vunpack.c.l.bf16 %v269
      %v272 = vunpack.c.l.bf16 %v270
      %v273 = vld [vmem:[%s2] sm:$0x1]
      %v275 = vlaneseq
      %v276 = vshrl.u32 %v275, 7
      %v277 = vsub.s32 0, %v276
      %v278 = vrot.slane %v273, %v277
      %v280 = vmul.f32 %v271, %v278
      %v281 = vmul.f32 %v272, %v278
      %v282 = vld [vmem:[%s3] sm:$0x1]
      %v284 = vlaneseq
      %v285 = vshrl.u32 %v284, 7
      %v286 = vsub.s32 0, %v285
      %v287 = vrot.slane %v282, %v286
      %v289 = vadd.f32 %v280, %v287
      %v290 = vadd.f32 %v281, %v287
      %v291 = vmax.f32 %v289, 0.0
      %v292 = vmax.f32 %v290, 0.0
      %v293 = vld [vmem:[%s1] sm:$0xff]
      %v294 = vld [vmem:[%s1 + $0x8] sm:$0xff]
      %v295 = vld [vmem:[%s1 + $0x10] sm:$0xff]
      %v296 = vld [vmem:[%s1 + $0x18] sm:$0xff]
      %v297 = vld [vmem:[%s1 + $0x20] sm:$0xff]
      %v298 = vld [vmem:[%s1 + $0x28] sm:$0xff]
      %v299 = vld [vmem:[%s1 + $0x30] sm:$0xff]
      %v300 = vld [vmem:[%s1 + $0x38] sm:$0xff]
      %v301 = vld [vmem:[%s1 + $0x40] sm:$0xff]
      %v302 = vld [vmem:[%s1 + $0x48] sm:$0xff]
      %v303 = vld [vmem:[%s1 + $0x50] sm:$0xff]
      %v304 = vld [vmem:[%s1 + $0x58] sm:$0xff]
      %v305 = vld [vmem:[%s1 + $0x60] sm:$0xff]
      %v306 = vld [vmem:[%s1 + $0x68] sm:$0xff]
      %s307 = scalar_lea.vmem %s1, 112
      %v308 = vld [vmem:[%s307] sm:$0xff]
      %v309 = vld [vmem:[%s307 + $0x8] sm:$0xff]
      %v310 = vld [vmem:[%s307 + $0x10] sm:$0xff]
      %v311 = vld [vmem:[%s307 + $0x18] sm:$0xff]
      %v312 = vld [vmem:[%s307 + $0x20] sm:$0xff]
      %v313 = vld [vmem:[%s307 + $0x28] sm:$0xff]
      %v314 = vld [vmem:[%s307 + $0x30] sm:$0xff]
      %v315 = vld [vmem:[%s307 + $0x38] sm:$0xff]
      %v316 = vld [vmem:[%s307 + $0x40] sm:$0xff]
      %v317 = vld [vmem:[%s307 + $0x48] sm:$0xff]
      %v318 = vld [vmem:[%s307 + $0x50] sm:$0xff]
      %v319 = vld [vmem:[%s307 + $0x58] sm:$0xff]
      %v320 = vld [vmem:[%s307 + $0x60] sm:$0xff]
      %v321 = vld [vmem:[%s307 + $0x68] sm:$0xff]
      %vm324 = vcmask 1046528
      %v325 = vrot.slane %v291, 1
      %v326 = vrot.slane %v292, 1
      %v327 = vsel %vm324, %v325, %v326
      %vm328 = vcmask 916480
      %v329 = vsel %vm328, %v327, 0
      %v331 = vsel %vm328, %v326, 0
      %333 = vmatprep.subr.mxu0 0.0
      %334 = vmatpush1.msra.mxu0 %v308
      %335 = vmatprep.subr.mxu0 0.0
      %336 = vmatpush1.msra.mxu0 %v309
      %337 = vmatprep.subr.mxu0 0.0
      %338 = vmatpush1.msra.mxu0 %v310
      %339 = vmatprep.subr.mxu0 0.0
      %340 = vmatpush1.msra.mxu0 %v311
      %341 = vmatprep.subr.mxu0 0.0
      %342 = vmatpush1.msra.mxu0 %v312
      %343 = vmatprep.subr.mxu0 0.0
      %344 = vmatpush1.msra.mxu0 %v313
      %345 = vmatprep.subr.mxu0 0.0
      %346 = vmatpush1.msra.mxu0 %v314
      %347 = vmatprep.subr.mxu0 0.0
      %348 = vmatpush1.msra.mxu0 %v315
      %349 = vmatprep.subr.mxu0 0.0
      %350 = vmatpush1.msra.mxu0 %v316
      %351 = vmatprep.subr.mxu0 0.0
      %352 = vmatpush1.msra.mxu0 %v317
      %353 = vmatprep.subr.mxu0 0.0
      %354 = vmatpush1.msra.mxu0 %v318
      %355 = vmatprep.subr.mxu0 0.0
      %356 = vmatpush1.msra.mxu0 %v319
      %357 = vmatprep.subr.mxu0 0.0
      %358 = vmatpush1.msra.mxu0 %v320
      %359 = vmatprep.subr.mxu0 0.0
      %360 = vmatpush1.msra.mxu0 %v321
      %361 = vmatprep.subr.mxu0 0.0
      %362 = vmatpush1.msra.mxu0 0.0
      %363 = vmatprep.subr.mxu0 0.0
      %364 = vmatpush1.msra.mxu0 0.0
      %365 = vmatprep.subr.mxu0 0.0
      %366 = vmatpush1.msra.mxu0 0.0
      %367 = vmatprep.subr.mxu0 0.0
      %368 = vmatpush1.msra.mxu0 0.0
      %369 = vmatprep.subr.mxu0 0.0
      %370 = vmatpush1.msra.mxu0 0.0
      %371 = vmatprep.subr.mxu0 0.0
      %372 = vmatpush1.msra.mxu0 0.0
      %373 = vmatprep.subr.mxu0 0.0
      %374 = vmatpush1.msra.mxu0 0.0
      %375 = vmatprep.subr.mxu0 0.0
      %376 = vmatpush1.msra.mxu0 0.0
      %377 = vmatprep.subr.mxu0 0.0
      %378 = vmatpush1.msra.mxu0 0.0
      %379 = vmatprep.subr.mxu0 0.0
      %380 = vmatpush1.msra.mxu0 0.0
      %381 = vmatprep.subr.mxu0 0.0
      %382 = vmatpush1.msra.mxu0 0.0
      %383 = vmatprep.subr.mxu0 0.0
      %384 = vmatpush1.msra.mxu0 0.0
      %385 = vmatprep.subr.mxu0 0.0
      %386 = vmatpush1.msra.mxu0 0.0
      %387 = vmatprep.subr.mxu0 0.0
      %388 = vmatpush1.msra.mxu0 0.0
      %389 = vmatprep.subr.mxu0 0.0
      %390 = vmatpush1.msra.mxu0 0.0
      %391 = vmatprep.subr.mxu0 0.0
      %392 = vmatpush1.msra.mxu0 0.0
      %393 = vmatprep.subr.mxu0 0.0
      %394 = vmatpush1.msra.mxu0 0.0
      %395 = vmatprep.subr.mxu0 0.0
      %396 = vmatpush1.msra.mxu0 0.0
      %397 = vmatprep.mubr.f32.mxu0 0.0
      %398 = vmatmul.mubr.f32.gmra.mrb[0].mxu0 %v329
      %v399 = vpop.f32.mrb[0].mxu0
      %v400 = vadd.f32 0.0, %v399
      %v401 = vpop.f32.mrb[0].mxu0
      %402 = vmatprep.mubr.f32.mxu0 0.0
      %403 = vmatmul.mubr.f32.gmra.mrb[0].mxu0 %v331
      %v404 = vpop.f32.mrb[0].mxu0
      %v405 = vadd.f32 0.0, %v404
      %v406 = vpop.f32.mrb[0].mxu0
      %407 = vdwg.mxu0
      %v408 = vsel %vm328, %v291, 0
      %v410 = vsel %vm328, %v292, 0
      %412 = vmatprep.subr.mxu0 0.0
      %413 = vmatpush1.msra.mxu0 %v293
      %414 = vmatprep.subr.mxu0 0.0
      %415 = vmatpush1.msra.mxu0 %v294
      %416 = vmatprep.subr.mxu0 0.0
      %417 = vmatpush1.msra.mxu0 %v295
      %418 = vmatprep.subr.mxu0 0.0
      %419 = vmatpush1.msra.mxu0 %v296
      %420 = vmatprep.subr.mxu0 0.0
      %421 = vmatpush1.msra.mxu0 %v297
      %422 = vmatprep.subr.mxu0 0.0
      %423 = vmatpush1.msra.mxu0 %v298
      %424 = vmatprep.subr.mxu0 0.0
      %425 = vmatpush1.msra.mxu0 %v299
      %426 = vmatprep.subr.mxu0 0.0
      %427 = vmatpush1.msra.mxu0 %v300
      %428 = vmatprep.subr.mxu0 0.0
      %429 = vmatpush1.msra.mxu0 %v301
      %430 = vmatprep.subr.mxu0 0.0
      %431 = vmatpush1.msra.mxu0 %v302
      %432 = vmatprep.subr.mxu0 0.0
      %433 = vmatpush1.msra.mxu0 %v303
      %434 = vmatprep.subr.mxu0 0.0
      %435 = vmatpush1.msra.mxu0 %v304
      %436 = vmatprep.subr.mxu0 0.0
      %437 = vmatpush1.msra.mxu0 %v305
      %438 = vmatprep.subr.mxu0 0.0
      %439 = vmatpush1.msra.mxu0 %v306
      %440 = vmatprep.subr.mxu0 0.0
      %441 = vmatpush1.msra.mxu0 0.0
      %442 = vmatprep.subr.mxu0 0.0
      %443 = vmatpush1.msra.mxu0 0.0
      %444 = vmatprep.subr.mxu0 0.0
      %445 = vmatpush1.msra.mxu0 0.0
      %446 = vmatprep.subr.mxu0 0.0
      %447 = vmatpush1.msra.mxu0 0.0
      %448 = vmatprep.subr.mxu0 0.0
      %449 = vmatpush1.msra.mxu0 0.0
      %450 = vmatprep.subr.mxu0 0.0
      %451 = vmatpush1.msra.mxu0 0.0
      %452 = vmatprep.subr.mxu0 0.0
      %453 = vmatpush1.msra.mxu0 0.0
      %454 = vmatprep.subr.mxu0 0.0
      %455 = vmatpush1.msra.mxu0 0.0
      %456 = vmatprep.subr.mxu0 0.0
      %457 = vmatpush1.msra.mxu0 0.0
      %458 = vmatprep.subr.mxu0 0.0
      %459 = vmatpush1.msra.mxu0 0.0
      %460 = vmatprep.subr.mxu0 0.0
      %461 = vmatpush1.msra.mxu0 0.0
      %462 = vmatprep.subr.mxu0 0.0
      %463 = vmatpush1.msra.mxu0 0.0
      %464 = vmatprep.subr.mxu0 0.0
      %465 = vmatpush1.msra.mxu0 0.0
      %466 = vmatprep.subr.mxu0 0.0
      %467 = vmatpush1.msra.mxu0 0.0
      %468 = vmatprep.subr.mxu0 0.0
      %469 = vmatpush1.msra.mxu0 0.0
      %470 = vmatprep.subr.mxu0 0.0
      %471 = vmatpush1.msra.mxu0 0.0
      %472 = vmatprep.subr.mxu0 0.0
      %473 = vmatpush1.msra.mxu0 0.0
      %474 = vmatprep.subr.mxu0 0.0
      %475 = vmatpush1.msra.mxu0 0.0
      %476 = vmatprep.mubr.f32.mxu0 0.0
      %477 = vmatmul.mubr.f32.gmra.mrb[0].mxu0 %v408
      %v478 = vpop.f32.mrb[0].mxu0
      %v479 = vadd.f32 %v400, %v478
      %v480 = vpop.f32.mrb[0].mxu0
      %481 = vmatprep.mubr.f32.mxu0 0.0
      %482 = vmatmul.mubr.f32.gmra.mrb[0].mxu0 %v410
      %v483 = vpop.f32.mrb[0].mxu0
      %v484 = vadd.f32 %v405, %v483
      %v485 = vpop.f32.mrb[0].mxu0
      %486 = vdwg.mxu0
      %s487 = scalar_lea.vmem %s1, 224
      %v488 = vld [vmem:[%s487] sm:$0xff]
      %v489 = vld [vmem:[%s487 + $0x8] sm:$0xff]
      %v490 = vld [vmem:[%s487 + $0x10] sm:$0xff]
      %v491 = vld [vmem:[%s487 + $0x18] sm:$0xff]
      %v492 = vld [vmem:[%s487 + $0x20] sm:$0xff]
      %v493 = vld [vmem:[%s487 + $0x28] sm:$0xff]
      %v494 = vld [vmem:[%s487 + $0x30] sm:$0xff]
      %v495 = vld [vmem:[%s487 + $0x38] sm:$0xff]
      %v496 = vld [vmem:[%s487 + $0x40] sm:$0xff]
      %v497 = vld [vmem:[%s487 + $0x48] sm:$0xff]
      %v498 = vld [vmem:[%s487 + $0x50] sm:$0xff]
      %v499 = vld [vmem:[%s487 + $0x58] sm:$0xff]
      %v500 = vld [vmem:[%s487 + $0x60] sm:$0xff]
      %v501 = vld [vmem:[%s487 + $0x68] sm:$0xff]
      %vm502 = vcmask 1045504
      %v503 = vrot.slane %v291, 2
      %v504 = vrot.slane %v292, 2
      %v505 = vsel %vm502, %v503, %v504
      %v506 = vsel %vm328, %v505, 0
      %v508 = vsel %vm328, %v504, 0
      %510 = vmatprep.subr.mxu0 0.0
      %511 = vmatpush1.msra.mxu0 %v488
      %512 = vmatprep.subr.mxu0 0.0
      %513 = vmatpush1.msra.mxu0 %v489
      %514 = vmatprep.subr.mxu0 0.0
      %515 = vmatpush1.msra.mxu0 %v490
      %516 = vmatprep.subr.mxu0 0.0
      %517 = vmatpush1.msra.mxu0 %v491
      %518 = vmatprep.subr.mxu0 0.0
      %519 = vmatpush1.msra.mxu0 %v492
      %520 = vmatprep.subr.mxu0 0.0
      %521 = vmatpush1.msra.mxu0 %v493
      %522 = vmatprep.subr.mxu0 0.0
      %523 = vmatpush1.msra.mxu0 %v494
      %524 = vmatprep.subr.mxu0 0.0
      %525 = vmatpush1.msra.mxu0 %v495
      %526 = vmatprep.subr.mxu0 0.0
      %527 = vmatpush1.msra.mxu0 %v496
      %528 = vmatprep.subr.mxu0 0.0
      %529 = vmatpush1.msra.mxu0 %v497
      %530 = vmatprep.subr.mxu0 0.0
      %531 = vmatpush1.msra.mxu0 %v498
      %532 = vmatprep.subr.mxu0 0.0
      %533 = vmatpush1.msra.mxu0 %v499
      %534 = vmatprep.subr.mxu0 0.0
      %535 = vmatpush1.msra.mxu0 %v500
      %536 = vmatprep.subr.mxu0 0.0
      %537 = vmatpush1.msra.mxu0 %v501
      %538 = vmatprep.subr.mxu0 0.0
      %539 = vmatpush1.msra.mxu0 0.0
      %540 = vmatprep.subr.mxu0 0.0
      %541 = vmatpush1.msra.mxu0 0.0
      %542 = vmatprep.subr.mxu0 0.0
      %543 = vmatpush1.msra.mxu0 0.0
      %544 = vmatprep.subr.mxu0 0.0
      %545 = vmatpush1.msra.mxu0 0.0
      %546 = vmatprep.subr.mxu0 0.0
      %547 = vmatpush1.msra.mxu0 0.0
      %548 = vmatprep.subr.mxu0 0.0
      %549 = vmatpush1.msra.mxu0 0.0
      %550 = vmatprep.subr.mxu0 0.0
      %551 = vmatpush1.msra.mxu0 0.0
      %552 = vmatprep.subr.mxu0 0.0
      %553 = vmatpush1.msra.mxu0 0.0
      %554 = vmatprep.subr.mxu0 0.0
      %555 = vmatpush1.msra.mxu0 0.0
      %556 = vmatprep.subr.mxu0 0.0
      %557 = vmatpush1.msra.mxu0 0.0
      %558 = vmatprep.subr.mxu0 0.0
      %559 = vmatpush1.msra.mxu0 0.0
      %560 = vmatprep.subr.mxu0 0.0
      %561 = vmatpush1.msra.mxu0 0.0
      %562 = vmatprep.subr.mxu0 0.0
      %563 = vmatpush1.msra.mxu0 0.0
      %564 = vmatprep.subr.mxu0 0.0
      %565 = vmatpush1.msra.mxu0 0.0
      %566 = vmatprep.subr.mxu0 0.0
      %567 = vmatpush1.msra.mxu0 0.0
      %568 = vmatprep.subr.mxu0 0.0
      %569 = vmatpush1.msra.mxu0 0.0
      %570 = vmatprep.subr.mxu0 0.0
      %571 = vmatpush1.msra.mxu0 0.0
      %572 = vmatprep.subr.mxu0 0.0
      %573 = vmatpush1.msra.mxu0 0.0
      %574 = vmatprep.mubr.f32.mxu0 0.0
      %575 = vmatmul.mubr.f32.gmra.mrb[0].mxu0 %v506
      %v576 = vpop.f32.mrb[0].mxu0
      %v577 = vadd.f32 0.0, %v576
      %v578 = vpop.f32.mrb[0].mxu0
      %579 = vmatprep.mubr.f32.mxu0 0.0
      %580 = vmatmul.mubr.f32.gmra.mrb[0].mxu0 %v508
      %v581 = vpop.f32.mrb[0].mxu0
      %v582 = vadd.f32 0.0, %v581
      %v583 = vpop.f32.mrb[0].mxu0
      %584 = vdwg.mxu0
      %v585 = vadd.f32 %v479, %v577
      %v586 = vadd.f32 %v484, %v582
      %v587 = vpack.c.bf16 %v586, %v585
      %v589 = vunpack.c.l.b16 %v587
      %v590 = vunpack.c.h.b16 %v587
      %v591 = vpack.c.b16 %v589, %v589
      %v592 = vpack.c.b16 %v590, %v590
      %vm595 = vcmask 781312
      %596 = vst.msk [vmem:[%s262] sm:$0xf] %vm595, %v591
      %vm597 = vcmask 779264
      %598 = vst.msk [vmem:[%s262 + $0x4] sm:$0x3] %vm597, %v592
      %vm599 = vcmask 785408
      %v600 = vsel %vm599, %v585, 0.0
      %v601 = vsel %vm595, %v586, 0.0
      %v602 = vadd.f32 %v600, %v601
      %v603 = vrot.slane %v602, 4
      %v604 = vadd.f32 %v602, %v603
      %v605 = vrot.slane %v604, 2
      %v606 = vadd.f32 %v604, %v605
      %v607 = vrot.slane %v606, 1
      %v608 = vadd.f32 %v606, %v607
      %vm609 = vcmask 778240
      %610 = vst.msk [vmem:[%s265] sm:$0x1] %vm609, %v608
      %v611 = vmul.f32 %v585, %v585
      %v612 = vmul.f32 %v586, %v586
      %v613 = vsel %vm599, %v611, 0.0
      %v614 = vsel %vm595, %v612, 0.0
      %v615 = vadd.f32 %v613, %v614
      %v616 = vrot.slane %v615, 4
      %v617 = vadd.f32 %v615, %v616
      %v618 = vrot.slane %v617, 2
      %v619 = vadd.f32 %v617, %v618
      %v620 = vrot.slane %v619, 1
      %v621 = vadd.f32 %v619, %v620
      %622 = vst.msk [vmem:[%s268] sm:$0x1] %vm609, %v621
      %p623 = scmp.lt.s32.totalorder %s18, 1
      %s624 = scalar_select %p623, %s18, 1
      %s625 = smul.addr %s624, 2
      %s626 = smul.addr %s625, 4
      %s627 = scalar_lea.vmem %s4, %s626
      %p628 = scmp.lt.s32.totalorder %s18, 1
      %s629 = scalar_select %p628, %s18, 1
      %s630 = scalar_lea.vmem %s5, %s629
      %p631 = scmp.lt.s32.totalorder %s18, 1
      %s632 = scalar_select %p631, %s18, 1
      %s633 = scalar_lea.vmem %s6, %s632
      // Predicated region
      $region37: #{decoder_block_forward.4} parent=35 // pred_check
        %p634 = pneg %p125
      $region38: #{decoder_block_forward.4} parent=35 // pred_check_branch
        %636 = sbr.rel (%p634) target = $region40
      $region39: #{decoder_block_forward.4} parent=35 // pred_region
        _
      $region40: #{decoder_block_forward.4} parent=35 // pred_fallthru
        _
      // Predicated region
      $region41: #{decoder_block_forward.4} parent=35 // pred_check
        %p637 = pneg %p151
      $region42: #{decoder_block_forward.4} parent=35 // pred_check_branch
        %639 = sbr.rel (%p637) target = $region44
      $region43: #{decoder_block_forward.4} parent=35 // pred_region
        _
      $region44: #{decoder_block_forward.4} parent=35 // pred_fallthru
        _
      // Predicated region
      $region45: #{decoder_block_forward.4} parent=35 // pred_check
        %p640 = pneg %p177
      $region46: #{decoder_block_forward.4} parent=35 // pred_check_branch
        %642 = sbr.rel (%p640) target = $region48
      $region47: #{decoder_block_forward.4} parent=35 // pred_region
        _
      $region48: #{decoder_block_forward.4} parent=35 // pred_fallthru
        _
    $region36: #{decoder_block_forward.4} parent=5 // pred_fallthru
      _
    %p643 = scmp.le.s32.totalorder 2, %s13
    // Predicated region
    $region49: #{decoder_block_forward.4} parent=5 // pred_check
      %p644 = pneg %p643
    $region50: #{decoder_block_forward.4} parent=5 // pred_check_branch
      %646 = sbr.rel (%p644) target = $region52
    $region51: #{decoder_block_forward.4} parent=5 // pred_region
      %s647 = ssub.s32 %s13, 2
      // Predicated region
      $region53: #{decoder_block_forward.4} parent=51 // pred_check
        %p648 = pneg %p131
      $region54: #{decoder_block_forward.4} parent=51 // pred_check_branch
        %650 = sbr.rel (%p648) target = $region56
      $region55: #{decoder_block_forward.4} parent=51 // pred_region
        %p651 = scmp.lt.s32.totalorder %s19, 1
        %s652 = scalar_select %p651, %s19, 1
        %s653 = smul.addr %s652, 2
        %s654 = smul.addr %s653, 4
        %s655 = scalar_lea.vmem %s4, %s654
      $region56: #{decoder_block_forward.4} parent=51 // pred_fallthru
        _
      // Predicated region
      $region57: #{decoder_block_forward.4} parent=51 // pred_check
        %p656 = pneg %p157
      $region58: #{decoder_block_forward.4} parent=51 // pred_check_branch
        %658 = sbr.rel (%p656) target = $region60
      $region59: #{decoder_block_forward.4} parent=51 // pred_region
        %p659 = scmp.lt.s32.totalorder %s19, 1
        %s660 = scalar_select %p659, %s19, 1
        %s661 = scalar_lea.vmem %s5, %s660
      $region60: #{decoder_block_forward.4} parent=51 // pred_fallthru
        _
      // Predicated region
      $region61: #{decoder_block_forward.4} parent=51 // pred_check
        %p662 = pneg %p183
      $region62: #{decoder_block_forward.4} parent=51 // pred_check_branch
        %664 = sbr.rel (%p662) target = $region64
      $region63: #{decoder_block_forward.4} parent=51 // pred_region
        %p665 = scmp.lt.s32.totalorder %s19, 1
        %s666 = scalar_select %p665, %s19, 1
        %s667 = scalar_lea.vmem %s6, %s666
      $region64: #{decoder_block_forward.4} parent=51 // pred_fallthru
        _
    $region52: #{decoder_block_forward.4} parent=5 // pred_fallthru
      _
  $region6: #{decoder_block_forward.4} parent=0 // loop_footer
    %s17 = sadd.s32 1, %s13
  $region7: #{decoder_block_forward.4} parent=0 // loop_footer_branch
    %12 = sbr.rel target = $region3
  $region8: #{decoder_block_forward.4} parent=0 // loop_exit
    _

// kernel: decoder_block_forward.3
$region0: #{decoder_block_forward.3}
  #allocation0 [shape = 'u32[]', space=smem, size = 0x4, offset = 0x4, fixed_abs, tag = 'smem constant byte address 0x4 - core index']
  #allocation1 [shape = 'u32[144,128]{1,0:T(1,128)}', space=vmem, size = 0x12000, scoped, tag = 'internal scratch']
  %s0 = inlined_call_operand.vmem [shape: f32[2,16,64], index: 0, kind: input, shape index: {}]
  %s1 = inlined_call_operand.vmem [shape: f32[3,64,112], index: 1, kind: input, shape index: {}]
  %s2 = inlined_call_operand.vmem [shape: bf16[2,14,112], index: 2, kind: output, shape index: {0}]
  %s3 = inlined_call_operand.vmem [shape: f32[2,1,112], index: 3, kind: output, shape index: {1}]
  %s4 = inlined_call_operand.vmem [shape: f32[2,1,112], index: 4, kind: output, shape index: {2}]
  %5 = xla_tuple %s2, %s3, %s4
  %s6 = sld [smem:[#allocation0]]
  $region57: #{decoder_block_forward.3} parent=0
    _
  %s8 = ssub.s32 1, %s6
  %s9 = scalar_select 0, %s8, %s6
  loop: start=0, step=1, limit=4
  $region2: #{decoder_block_forward.3} parent=0 // loop_pre_header
    _
  $region3: #{decoder_block_forward.3} parent=0 // loop_header
    %s11 = sphi 0, %s15
    %p12 = scmp.ge.s32.totalorder %s11, 4
    %s21 = sphi 0, %s23
    %s24 = sphi 0, %s21
    %s25 = sphi 0, %s24
    %s41 = sphi 0, %s25
    %s45 = sphi 0, %s45
    %s47 = sphi 0, %s45
    %s48 = sphi 0, %s47
    %s62 = sphi 0, %s48
    %s68 = sphi 0, %s70
    %s71 = sphi 0, %s68
    %s72 = sphi 0, %s71
    %s88 = sphi 0, %s72
    %s94 = sphi 0, %s96
    %s97 = sphi 0, %s94
    %s98 = sphi 0, %s97
    %s114 = sphi 0, %s98
    %s120 = sphi 0, %s122
    %s123 = sphi 0, %s120
    %s124 = sphi 0, %s123
    %s140 = sphi 0, %s124
  $region4: #{decoder_block_forward.3} parent=0 // loop_header_branch
    %14 = sbr.rel (%p12) target = $region8
  $region5: #{decoder_block_forward.3} parent=0 // loop_body
    %s16 = ssub.s32 %s11, 1
    %s17 = ssub.s32 %s11, 2
    %s18 = sadd.s32 %s11, 1
    %s19 = ssub.s32 %s11, %s18
    %p20 = scmp.eq.s32.totalorder %s19, 0
    %s22 = sadd.s32 %s21, 1
    %s23 = scalar_select %p20, %s21, %s22
    %p26 = pneg %p20
    %p27 = scmp.eq.s32.totalorder %s11, 1
    %p28 = por %p26, %p27
    %p29 = scmp.ne.s32.totalorder %s21, %s24
    %p30 = scmp.eq.s32.totalorder %s11, 0
    %p31 = por %p29, %p30
    %p32 = scmp.ne.s32.totalorder %s21, %s24
    %p33 = scmp.eq.s32.totalorder %s16, 1
    %p34 = por %p32, %p33
    %p35 = scmp.ne.s32.totalorder %s24, %s25
    %p36 = scmp.eq.s32.totalorder %s16, 0
    %p37 = por %p35, %p36
    %p38 = scmp.ne.s32.totalorder %s24, %s25
    %p39 = scmp.eq.s32.totalorder %s17, 1
    %p40 = por %p38, %p39
    %p42 = scmp.ne.s32.totalorder %s25, %s41
    %p43 = scmp.eq.s32.totalorder %s17, 0
    %p44 = por %p42, %p43
    %s46 = sadd.s32 %s45, 1
    %p49 = scmp.eq.s32.totalorder %s11, 1
    %p50 = scmp.ne.s32.totalorder %s45, %s47
    %p51 = scmp.eq.s32.totalorder %s11, 0
    %p52 = por %p50, %p51
    %p53 = scmp.ne.s32.totalorder %s45, %s47
    %p54 = scmp.eq.s32.totalorder %s16, 1
    %p55 = por %p53, %p54
    %p56 = scmp.ne.s32.totalorder %s47, %s48
    %p57 = scmp.eq.s32.totalorder %s16, 0
    %p58 = por %p56, %p57
    %p59 = scmp.ne.s32.totalorder %s47, %s48
    %p60 = scmp.eq.s32.totalorder %s17, 1
    %p61 = por %p59, %p60
    %p63 = scmp.ne.s32.totalorder %s48, %s62
    %p64 = scmp.eq.s32.totalorder %s17, 0
    %p65 = por %p63, %p64
    %s66 = ssub.s32 %s11, %s18
    %p67 = scmp.eq.s32.totalorder %s66, 0
    %s69 = sadd.s32 %s68, 1
    %s70 = scalar_select %p67, %s68, %s69
    %p73 = pneg %p67
    %p74 = scmp.eq.s32.totalorder %s11, 1
    %p75 = por %p73, %p74
    %p76 = scmp.ne.s32.totalorder %s68, %s71
    %p77 = scmp.eq.s32.totalorder %s11, 0
    %p78 = por %p76, %p77
    %p79 = scmp.ne.s32.totalorder %s68, %s71
    %p80 = scmp.eq.s32.totalorder %s16, 1
    %p81 = por %p79, %p80
    %p82 = scmp.ne.s32.totalorder %s71, %s72
    %p83 = scmp.eq.s32.totalorder %s16, 0
    %p84 = por %p82, %p83
    %p85 = scmp.ne.s32.totalorder %s71, %s72
    %p86 = scmp.eq.s32.totalorder %s17, 1
    %p87 = por %p85, %p86
    %p89 = scmp.ne.s32.totalorder %s72, %s88
    %p90 = scmp.eq.s32.totalorder %s17, 0
    %p91 = por %p89, %p90
    %s92 = ssub.s32 %s11, %s18
    %p93 = scmp.eq.s32.totalorder %s92, 0
    %s95 = sadd.s32 %s94, 1
    %s96 = scalar_select %p93, %s94, %s95
    %p99 = pneg %p93
    %p100 = scmp.eq.s32.totalorder %s11, 1
    %p101 = por %p99, %p100
    %p102 = scmp.ne.s32.totalorder %s94, %s97
    %p103 = scmp.eq.s32.totalorder %s11, 0
    %p104 = por %p102, %p103
    %p105 = scmp.ne.s32.totalorder %s94, %s97
    %p106 = scmp.eq.s32.totalorder %s16, 1
    %p107 = por %p105, %p106
    %p108 = scmp.ne.s32.totalorder %s97, %s98
    %p109 = scmp.eq.s32.totalorder %s16, 0
    %p110 = por %p108, %p109
    %p111 = scmp.ne.s32.totalorder %s97, %s98
    %p112 = scmp.eq.s32.totalorder %s17, 1
    %p113 = por %p111, %p112
    %p115 = scmp.ne.s32.totalorder %s98, %s114
    %p116 = scmp.eq.s32.totalorder %s17, 0
    %p117 = por %p115, %p116
    %s118 = ssub.s32 %s11, %s18
    %p119 = scmp.eq.s32.totalorder %s118, 0
    %s121 = sadd.s32 %s120, 1
    %s122 = scalar_select %p119, %s120, %s121
    %p125 = pneg %p119
    %p126 = scmp.eq.s32.totalorder %s11, 1
    %p127 = por %p125, %p126
    %p128 = scmp.ne.s32.totalorder %s120, %s123
    %p129 = scmp.eq.s32.totalorder %s11, 0
    %p130 = por %p128, %p129
    %p131 = scmp.ne.s32.totalorder %s120, %s123
    %p132 = scmp.eq.s32.totalorder %s16, 1
    %p133 = por %p131, %p132
    %p134 = scmp.ne.s32.totalorder %s123, %s124
    %p135 = scmp.eq.s32.totalorder %s16, 0
    %p136 = por %p134, %p135
    %p137 = scmp.ne.s32.totalorder %s123, %s124
    %p138 = scmp.eq.s32.totalorder %s17, 1
    %p139 = por %p137, %p138
    %p141 = scmp.ne.s32.totalorder %s124, %s140
    %p142 = scmp.eq.s32.totalorder %s17, 0
    %p143 = por %p141, %p142
    %p144 = scmp.le.s32.totalorder 1, %s11
    %p145 = scmp.lt.s32.totalorder %s11, 3
    %p146 = pnand %p144, %p145
    %p147 = pneg %p146
    // Predicated region
    $region9: #{decoder_block_forward.3} parent=5 // pred_check
      _
    $region10: #{decoder_block_forward.3} parent=5 // pred_check_branch
      %149 = sbr.rel (%p146) target = $region12
    $region11: #{decoder_block_forward.3} parent=5 // pred_region
      %s150 = ssub.s32 %s11, 1
      // Predicated region
      $region13: #{decoder_block_forward.3} parent=11 // pred_check
        %p151 = pneg %p58
      $region14: #{decoder_block_forward.3} parent=11 // pred_check_branch
        %153 = sbr.rel (%p151) target = $region16
      $region15: #{decoder_block_forward.3} parent=11 // pred_region
        _
      $region16: #{decoder_block_forward.3} parent=11 // pred_fallthru
        _
    $region12: #{decoder_block_forward.3} parent=5 // pred_fallthru
      _
    %p154 = scmp.lt.s32.totalorder %s11, 2
    // Predicated region
    $region17: #{decoder_block_forward.3} parent=5 // pred_check
      %p155 = pneg %p154
    $region18: #{decoder_block_forward.3} parent=5 // pred_check_branch
      %157 = sbr.rel (%p155) target = $region20
    $region19: #{decoder_block_forward.3} parent=5 // pred_region
      // Predicated region
      $region21: #{decoder_block_forward.3} parent=19 // pred_check
        %p158 = pneg %p31
      $region22: #{decoder_block_forward.3} parent=19 // pred_check_branch
        %160 = sbr.rel (%p158) target = $region24
      $region23: #{decoder_block_forward.3} parent=19 // pred_region
        %p161 = scmp.lt.s32.totalorder %s11, 1
        %s162 = scalar_select %p161, %s11, 1
        %s163 = smul.addr %s162, 2
        %s164 = smul.addr %s163, 8
        %s165 = scalar_lea.vmem %s0, %s164
      $region24: #{decoder_block_forward.3} parent=19 // pred_fallthru
        _
    $region20: #{decoder_block_forward.3} parent=5 // pred_fallthru
      _
    %p166 = scmp.le.s32.totalorder 1, %s11
    %p167 = scmp.lt.s32.totalorder %s11, 3
    %p168 = pnand %p166, %p167
    %p169 = pneg %p168
    // Predicated region
    $region25: #{decoder_block_forward.3} parent=5 // pred_check
      _
    $region26: #{decoder_block_forward.3} parent=5 // pred_check_branch
      %171 = sbr.rel (%p168) target = $region28
    $region27: #{decoder_block_forward.3} parent=5 // pred_region
      %s172 = ssub.s32 %s11, 1
      %p173 = scmp.lt.s32.totalorder %s16, 1
      %s174 = scalar_select %p173, %s16, 1
      %s175 = smul.addr %s174, 2
      %s176 = smul.addr %s175, 8
      %s177 = scalar_lea.vmem %s0, %s176
      %p178 = pneg %p37
      %p179 = pneg %p34
      %p180 = pneg %p58
      %p181 = pneg %p55
      %p182 = pneg %p84
      %p183 = pneg %p81
      %p184 = scmp.lt.s32.totalorder %s16, 1
      %s185 = scalar_select %p184, %s16, 1
      %s186 = smul.addr %s185, 2
      %s187 = smul.addr %s186, 4
      %s188 = scalar_lea.vmem %s2, %s187
      %p189 = pneg %p110
      %p190 = pneg %p107
      %p191 = scmp.lt.s32.totalorder %s16, 1
      %s192 = scalar_select %p191, %s16, 1
      %s193 = scalar_lea.vmem %s3, %s192
      %p194 = pneg %p136
      %p195 = pneg %p133
      %p196 = scmp.lt.s32.totalorder %s16, 1
      %s197 = scalar_select %p196, %s16, 1
      %s198 = scalar_lea.vmem %s4, %s197
      %p199 = scmp.lt.s32.totalorder %s16, 1
      %s200 = scalar_select %p199, %s16, 1
      %s201 = smul.addr %s200, 2
      %s202 = smul.addr %s201, 8
      %s203 = scalar_lea.vmem %s0, %s202
      %p204 = scmp.lt.s32.totalorder %s16, 1
      %s205 = scalar_select %p204, %s16, 1
      %s206 = smul.addr %s205, 2
      %s207 = smul.addr %s206, 4
      %s208 = scalar_lea.vmem %s2, %s207
      %p209 = scmp.lt.s32.totalorder %s16, 1
      %s210 = scalar_select %p209, %s16, 1
      %s211 = scalar_lea.vmem %s3, %s210
      %p212 = scmp.lt.s32.totalorder %s16, 1
      %s213 = scalar_select %p212, %s16, 1
      %s214 = scalar_lea.vmem %s4, %s213
      %v215 = vld [vmem:[%s203] sm:$0xff]
      %v216 = vld [vmem:[%s203 + $0x8] sm:$0xff]
      %v217 = vld [vmem:[%s1] sm:$0xff]
      %v218 = vld [vmem:[%s1 + $0x8] sm:$0xff]
      %v219 = vld [vmem:[%s1 + $0x10] sm:$0xff]
      %v220 = vld [vmem:[%s1 + $0x18] sm:$0xff]
      %v221 = vld [vmem:[%s1 + $0x20] sm:$0xff]
      %v222 = vld [vmem:[%s1 + $0x28] sm:$0xff]
      %v223 = vld [vmem:[%s1 + $0x30] sm:$0xff]
      %v224 = vld [vmem:[%s1 + $0x38] sm:$0xff]
      %s225 = scalar_lea.vmem %s1, 64
      %v226 = vld [vmem:[%s225] sm:$0xff]
      %v227 = vld [vmem:[%s225 + $0x8] sm:$0xff]
      %v228 = vld [vmem:[%s225 + $0x10] sm:$0xff]
      %v229 = vld [vmem:[%s225 + $0x18] sm:$0xff]
      %v230 = vld [vmem:[%s225 + $0x20] sm:$0xff]
      %v231 = vld [vmem:[%s225 + $0x28] sm:$0xff]
      %v232 = vld [vmem:[%s225 + $0x30] sm:$0xff]
      %v233 = vld [vmem:[%s225 + $0x38] sm:$0xff]
      %vm236 = vcmask 1046528
      %v237 = vrot.slane %v215, 1
      %v238 = vrot.slane %v216, 1
      %v239 = vsel %vm236, %v237, %v238
      %vm240 = vcmask 523264
      %v241 = vsel %vm240, %v239, 0
      %v243 = vsel %vm240, %v238, 0
      %245 = vmatprep.subr.mxu0 0.0
      %246 = vmatpush1.msra.mxu0 %v226
      %247 = vmatprep.subr.mxu0 0.0
      %248 = vmatpush1.msra.mxu0 %v227
      %249 = vmatprep.subr.mxu0 0.0
      %250 = vmatpush1.msra.mxu0 %v228
      %251 = vmatprep.subr.mxu0 0.0
      %252 = vmatpush1.msra.mxu0 %v229
      %253 = vmatprep.subr.mxu0 0.0
      %254 = vmatpush1.msra.mxu0 %v230
      %255 = vmatprep.subr.mxu0 0.0
      %256 = vmatpush1.msra.mxu0 %v231
      %257 = vmatprep.subr.mxu0 0.0
      %258 = vmatpush1.msra.mxu0 %v232
      %259 = vmatprep.subr.mxu0 0.0
      %260 = vmatpush1.msra.mxu0 %v233
      %261 = vmatprep.subr.mxu0 0.0
      %262 = vmatpush1.msra.mxu0 0.0
      %263 = vmatprep.subr.mxu0 0.0
      %264 = vmatpush1.msra.mxu0 0.0
      %265 = vmatprep.subr.mxu0 0.0
      %266 = vmatpush1.msra.mxu0 0.0
      %267 = vmatprep.subr.mxu0 0.0
      %268 = vmatpush1.msra.mxu0 0.0
      %269 = vmatprep.subr.mxu0 0.0
      %270 = vmatpush1.msra.mxu0 0.0
      %271 = vmatprep.subr.mxu0 0.0
      %272 = vmatpush1.msra.mxu0 0.0
      %273 = vmatprep.subr.mxu0 0.0
      %274 = vmatpush1.msra.mxu0 0.0
      %275 = vmatprep.subr.mxu0 0.0
      %276 = vmatpush1.msra.mxu0 0.0
      %277 = vmatprep.subr.mxu0 0.0
      %278 = vmatpush1.msra.mxu0 0.0
      %279 = vmatprep.subr.mxu0 0.0
      %280 = vmatpush1.msra.mxu0 0.0
      %281 = vmatprep.subr.mxu0 0.0
      %282 = vmatpush1.msra.mxu0 0.0
      %283 = vmatprep.subr.mxu0 0.0
      %284 = vmatpush1.msra.mxu0 0.0
      %285 = vmatprep.subr.mxu0 0.0
      %286 = vmatpush1.msra.mxu0 0.0
      %287 = vmatprep.subr.mxu0 0.0
      %288 = vmatpush1.msra.mxu0 0.0
      %289 = vmatprep.subr.mxu0 0.0
      %290 = vmatpush1.msra.mxu0 0.0
      %291 = vmatprep.subr.mxu0 0.0
      %292 = vmatpush1.msra.mxu0 0.0
      %293 = vmatprep.subr.mxu0 0.0
      %294 = vmatpush1.msra.mxu0 0.0
      %295 = vmatprep.subr.mxu0 0.0
      %296 = vmatpush1.msra.mxu0 0.0
      %297 = vmatprep.subr.mxu0 0.0
      %298 = vmatpush1.msra.mxu0 0.0
      %299 = vmatprep.subr.mxu0 0.0
      %300 = vmatpush1.msra.mxu0 0.0
      %301 = vmatprep.subr.mxu0 0.0
      %302 = vmatpush1.msra.mxu0 0.0
      %303 = vmatprep.subr.mxu0 0.0
      %304 = vmatpush1.msra.mxu0 0.0
      %305 = vmatprep.subr.mxu0 0.0
      %306 = vmatpush1.msra.mxu0 0.0
      %307 = vmatprep.subr.mxu0 0.0
      %308 = vmatpush1.msra.mxu0 0.0
      %309 = vmatprep.mubr.f32.mxu0 0.0
      %310 = vmatmul.mubr.f32.gmra.mrb[0].mxu0 %v241
      %v311 = vpop.f32.mrb[0].mxu0
      %v312 = vadd.f32 0.0, %v311
      %v313 = vpop.f32.mrb[0].mxu0
      %314 = vmatprep.mubr.f32.mxu0 0.0
      %315 = vmatmul.mubr.f32.gmra.mrb[0].mxu0 %v243
      %v316 = vpop.f32.mrb[0].mxu0
      %v317 = vadd.f32 0.0, %v316
      %v318 = vpop.f32.mrb[0].mxu0
      %319 = vdwg.mxu0
      %v320 = vsel %vm240, %v215, 0
      %v322 = vsel %vm240, %v216, 0
      %324 = vmatprep.subr.mxu0 0.0
      %325 = vmatpush1.msra.mxu0 %v217
      %326 = vmatprep.subr.mxu0 0.0
      %327 = vmatpush1.msra.mxu0 %v218
      %328 = vmatprep.subr.mxu0 0.0
      %329 = vmatpush1.msra.mxu0 %v219
      %330 = vmatprep.subr.mxu0 0.0
      %331 = vmatpush1.msra.mxu0 %v220
      %332 = vmatprep.subr.mxu0 0.0
      %333 = vmatpush1.msra.mxu0 %v221
      %334 = vmatprep.subr.mxu0 0.0
      %335 = vmatpush1.msra.mxu0 %v222
      %336 = vmatprep.subr.mxu0 0.0
      %337 = vmatpush1.msra.mxu0 %v223
      %338 = vmatprep.subr.mxu0 0.0
      %339 = vmatpush1.msra.mxu0 %v224
      %340 = vmatprep.subr.mxu0 0.0
      %341 = vmatpush1.msra.mxu0 0.0
      %342 = vmatprep.subr.mxu0 0.0
      %343 = vmatpush1.msra.mxu0 0.0
      %344 = vmatprep.subr.mxu0 0.0
      %345 = vmatpush1.msra.mxu0 0.0
      %346 = vmatprep.subr.mxu0 0.0
      %347 = vmatpush1.msra.mxu0 0.0
      %348 = vmatprep.subr.mxu0 0.0
      %349 = vmatpush1.msra.mxu0 0.0
      %350 = vmatprep.subr.mxu0 0.0
      %351 = vmatpush1.msra.mxu0 0.0
      %352 = vmatprep.subr.mxu0 0.0
      %353 = vmatpush1.msra.mxu0 0.0
      %354 = vmatprep.subr.mxu0 0.0
      %355 = vmatpush1.msra.mxu0 0.0
      %356 = vmatprep.subr.mxu0 0.0
      %357 = vmatpush1.msra.mxu0 0.0
      %358 = vmatprep.subr.mxu0 0.0
      %359 = vmatpush1.msra.mxu0 0.0
      %360 = vmatprep.subr.mxu0 0.0
      %361 = vmatpush1.msra.mxu0 0.0
      %362 = vmatprep.subr.mxu0 0.0
      %363 = vmatpush1.msra.mxu0 0.0
      %364 = vmatprep.subr.mxu0 0.0
      %365 = vmatpush1.msra.mxu0 0.0
      %366 = vmatprep.subr.mxu0 0.0
      %367 = vmatpush1.msra.mxu0 0.0
      %368 = vmatprep.subr.mxu0 0.0
      %369 = vmatpush1.msra.mxu0 0.0
      %370 = vmatprep.subr.mxu0 0.0
      %371 = vmatpush1.msra.mxu0 0.0
      %372 = vmatprep.subr.mxu0 0.0
      %373 = vmatpush1.msra.mxu0 0.0
      %374 = vmatprep.subr.mxu0 0.0
      %375 = vmatpush1.msra.mxu0 0.0
      %376 = vmatprep.subr.mxu0 0.0
      %377 = vmatpush1.msra.mxu0 0.0
      %378 = vmatprep.subr.mxu0 0.0
      %379 = vmatpush1.msra.mxu0 0.0
      %380 = vmatprep.subr.mxu0 0.0
      %381 = vmatpush1.msra.mxu0 0.0
      %382 = vmatprep.subr.mxu0 0.0
      %383 = vmatpush1.msra.mxu0 0.0
      %384 = vmatprep.subr.mxu0 0.0
      %385 = vmatpush1.msra.mxu0 0.0
      %386 = vmatprep.subr.mxu0 0.0
      %387 = vmatpush1.msra.mxu0 0.0
      %388 = vmatprep.mubr.f32.mxu0 0.0
      %389 = vmatmul.mubr.f32.gmra.mrb[0].mxu0 %v320
      %v390 = vpop.f32.mrb[0].mxu0
      %v391 = vadd.f32 %v312, %v390
      %v392 = vpop.f32.mrb[0].mxu0
      %393 = vmatprep.mubr.f32.mxu0 0.0
      %394 = vmatmul.mubr.f32.gmra.mrb[0].mxu0 %v322
      %v395 = vpop.f32.mrb[0].mxu0
      %v396 = vadd.f32 %v317, %v395
      %v397 = vpop.f32.mrb[0].mxu0
      %398 = vdwg.mxu0
      %s399 = scalar_lea.vmem %s1, 128
      %v400 = vld [vmem:[%s399] sm:$0xff]
      %v401 = vld [vmem:[%s399 + $0x8] sm:$0xff]
      %v402 = vld [vmem:[%s399 + $0x10] sm:$0xff]
      %v403 = vld [vmem:[%s399 + $0x18] sm:$0xff]
      %v404 = vld [vmem:[%s399 + $0x20] sm:$0xff]
      %v405 = vld [vmem:[%s399 + $0x28] sm:$0xff]
      %v406 = vld [vmem:[%s399 + $0x30] sm:$0xff]
      %v407 = vld [vmem:[%s399 + $0x38] sm:$0xff]
      %vm408 = vcmask 1045504
      %v409 = vrot.slane %v215, 2
      %v410 = vrot.slane %v216, 2
      %v411 = vsel %vm408, %v409, %v410
      %v412 = vsel %vm240, %v411, 0
      %v414 = vsel %vm240, %v410, 0
      %416 = vmatprep.subr.mxu0 0.0
      %417 = vmatpush1.msra.mxu0 %v400
      %418 = vmatprep.subr.mxu0 0.0
      %419 = vmatpush1.msra.mxu0 %v401
      %420 = vmatprep.subr.mxu0 0.0
      %421 = vmatpush1.msra.mxu0 %v402
      %422 = vmatprep.subr.mxu0 0.0
      %423 = vmatpush1.msra.mxu0 %v403
      %424 = vmatprep.subr.mxu0 0.0
      %425 = vmatpush1.msra.mxu0 %v404
      %426 = vmatprep.subr.mxu0 0.0
      %427 = vmatpush1.msra.mxu0 %v405
      %428 = vmatprep.subr.mxu0 0.0
      %429 = vmatpush1.msra.mxu0 %v406
      %430 = vmatprep.subr.mxu0 0.0
      %431 = vmatpush1.msra.mxu0 %v407
      %432 = vmatprep.subr.mxu0 0.0
      %433 = vmatpush1.msra.mxu0 0.0
      %434 = vmatprep.subr.mxu0 0.0
      %435 = vmatpush1.msra.mxu0 0.0
      %436 = vmatprep.subr.mxu0 0.0
      %437 = vmatpush1.msra.mxu0 0.0
      %438 = vmatprep.subr.mxu0 0.0
      %439 = vmatpush1.msra.mxu0 0.0
      %440 = vmatprep.subr.mxu0 0.0
      %441 = vmatpush1.msra.mxu0 0.0
      %442 = vmatprep.subr.mxu0 0.0
      %443 = vmatpush1.msra.mxu0 0.0
      %444 = vmatprep.subr.mxu0 0.0
      %445 = vmatpush1.msra.mxu0 0.0
      %446 = vmatprep.subr.mxu0 0.0
      %447 = vmatpush1.msra.mxu0 0.0
      %448 = vmatprep.subr.mxu0 0.0
      %449 = vmatpush1.msra.mxu0 0.0
      %450 = vmatprep.subr.mxu0 0.0
      %451 = vmatpush1.msra.mxu0 0.0
      %452 = vmatprep.subr.mxu0 0.0
      %453 = vmatpush1.msra.mxu0 0.0
      %454 = vmatprep.subr.mxu0 0.0
      %455 = vmatpush1.msra.mxu0 0.0
      %456 = vmatprep.subr.mxu0 0.0
      %457 = vmatpush1.msra.mxu0 0.0
      %458 = vmatprep.subr.mxu0 0.0
      %459 = vmatpush1.msra.mxu0 0.0
      %460 = vmatprep.subr.mxu0 0.0
      %461 = vmatpush1.msra.mxu0 0.0
      %462 = vmatprep.subr.mxu0 0.0
      %463 = vmatpush1.msra.mxu0 0.0
      %464 = vmatprep.subr.mxu0 0.0
      %465 = vmatpush1.msra.mxu0 0.0
      %466 = vmatprep.subr.mxu0 0.0
      %467 = vmatpush1.msra.mxu0 0.0
      %468 = vmatprep.subr.mxu0 0.0
      %469 = vmatpush1.msra.mxu0 0.0
      %470 = vmatprep.subr.mxu0 0.0
      %471 = vmatpush1.msra.mxu0 0.0
      %472 = vmatprep.subr.mxu0 0.0
      %473 = vmatpush1.msra.mxu0 0.0
      %474 = vmatprep.subr.mxu0 0.0
      %475 = vmatpush1.msra.mxu0 0.0
      %476 = vmatprep.subr.mxu0 0.0
      %477 = vmatpush1.msra.mxu0 0.0
      %478 = vmatprep.subr.mxu0 0.0
      %479 = vmatpush1.msra.mxu0 0.0
      %480 = vmatprep.mubr.f32.mxu0 0.0
      %481 = vmatmul.mubr.f32.gmra.mrb[0].mxu0 %v412
      %v482 = vpop.f32.mrb[0].mxu0
      %v483 = vadd.f32 0.0, %v482
      %v484 = vpop.f32.mrb[0].mxu0
      %485 = vmatprep.mubr.f32.mxu0 0.0
      %486 = vmatmul.mubr.f32.gmra.mrb[0].mxu0 %v414
      %v487 = vpop.f32.mrb[0].mxu0
      %v488 = vadd.f32 0.0, %v487
      %v489 = vpop.f32.mrb[0].mxu0
      %490 = vdwg.mxu0
      %v491 = vadd.f32 %v391, %v483
      %v492 = vadd.f32 %v396, %v488
      %v493 = vpack.c.bf16 %v492, %v491
      %v495 = vunpack.c.l.b16 %v493
      %v496 = vunpack.c.h.b16 %v493
      %v497 = vpack.c.b16 %v495, %v495
      %v498 = vpack.c.b16 %v496, %v496
      %vm501 = vcmask 912384
      %502 = vst.msk [vmem:[%s208] sm:$0xf] %vm501, %v497
      %vm503 = vcmask 911360
      %504 = vst.msk [vmem:[%s208 + $0x4] sm:$0x7] %vm503, %v498
      %vm505 = vcmask 916480
      %v506 = vsel %vm505, %v491, 0.0
      %vm507 = vcmask 914432
      %v508 = vsel %vm507, %v492, 0.0
      %v509 = vadd.f32 %v506, %v508
      %v510 = vrot.slane %v509, 4
      %v511 = vadd.f32 %v509, %v510
      %v512 = vrot.slane %v511, 2
      %v513 = vadd.f32 %v511, %v512
      %v514 = vrot.slane %v513, 1
      %v515 = vadd.f32 %v513, %v514
      %vm516 = vcmask 909312
      %517 = vst.msk [vmem:[%s211] sm:$0x1] %vm516, %v515
      %v518 = vmul.f32 %v491, %v491
      %v519 = vmul.f32 %v492, %v492
      %v520 = vsel %vm505, %v518, 0.0
      %v521 = vsel %vm507, %v519, 0.0
      %v522 = vadd.f32 %v520, %v521
      %v523 = vrot.slane %v522, 4
      %v524 = vadd.f32 %v522, %v523
      %v525 = vrot.slane %v524, 2
      %v526 = vadd.f32 %v524, %v525
      %v527 = vrot.slane %v526, 1
      %v528 = vadd.f32 %v526, %v527
      %529 = vst.msk [vmem:[%s214] sm:$0x1] %vm516, %v528
      %p530 = scmp.lt.s32.totalorder %s16, 1
      %s531 = scalar_select %p530, %s16, 1
      %s532 = smul.addr %s531, 2
      %s533 = smul.addr %s532, 4
      %s534 = scalar_lea.vmem %s2, %s533
      %p535 = scmp.lt.s32.totalorder %s16, 1
      %s536 = scalar_select %p535, %s16, 1
      %s537 = scalar_lea.vmem %s3, %s536
      %p538 = scmp.lt.s32.totalorder %s16, 1
      %s539 = scalar_select %p538, %s16, 1
      %s540 = scalar_lea.vmem %s4, %s539
      // Predicated region
      $region29: #{decoder_block_forward.3} parent=27 // pred_check
        %p541 = pneg %p81
      $region30: #{decoder_block_forward.3} parent=27 // pred_check_branch
        %543 = sbr.rel (%p541) target = $region32
      $region31: #{decoder_block_forward.3} parent=27 // pred_region
        _
      $region32: #{decoder_block_forward.3} parent=27 // pred_fallthru
        _
      // Predicated region
      $region33: #{decoder_block_forward.3} parent=27 // pred_check
        %p544 = pneg %p107
      $region34: #{decoder_block_forward.3} parent=27 // pred_check_branch
        %546 = sbr.rel (%p544) target = $region36
      $region35: #{decoder_block_forward.3} parent=27 // pred_region
        _
      $region36: #{decoder_block_forward.3} parent=27 // pred_fallthru
        _
      // Predicated region
      $region37: #{decoder_block_forward.3} parent=27 // pred_check
        %p547 = pneg %p133
      $region38: #{decoder_block_forward.3} parent=27 // pred_check_branch
        %549 = sbr.rel (%p547) target = $region40
      $region39: #{decoder_block_forward.3} parent=27 // pred_region
        _
      $region40: #{decoder_block_forward.3} parent=27 // pred_fallthru
        _
    $region28: #{decoder_block_forward.3} parent=5 // pred_fallthru
      _
    %p550 = scmp.le.s32.totalorder 2, %s11
    // Predicated region
    $region41: #{decoder_block_forward.3} parent=5 // pred_check
      %p551 = pneg %p550
    $region42: #{decoder_block_forward.3} parent=5 // pred_check_branch
      %553 = sbr.rel (%p551) target = $region44
    $region43: #{decoder_block_forward.3} parent=5 // pred_region
      %s554 = ssub.s32 %s11, 2
      // Predicated region
      $region45: #{decoder_block_forward.3} parent=43 // pred_check
        %p555 = pneg %p87
      $region46: #{decoder_block_forward.3} parent=43 // pred_check_branch
        %557 = sbr.rel (%p555) target = $region48
      $region47: #{decoder_block_forward.3} parent=43 // pred_region
        %p558 = scmp.lt.s32.totalorder %s17, 1
        %s559 = scalar_select %p558, %s17, 1
        %s560 = smul.addr %s559, 2
        %s561 = smul.addr %s560, 4
        %s562 = scalar_lea.vmem %s2, %s561
      $region48: #{decoder_block_forward.3} parent=43 // pred_fallthru
        _
      // Predicated region
      $region49: #{decoder_block_forward.3} parent=43 // pred_check
        %p563 = pneg %p113
      $region50: #{decoder_block_forward.3} parent=43 // pred_check_branch
        %565 = sbr.rel (%p563) target = $region52
      $region51: #{decoder_block_forward.3} parent=43 // pred_region
        %p566 = scmp.lt.s32.totalorder %s17, 1
        %s567 = scalar_select %p566, %s17, 1
        %s568 = scalar_lea.vmem %s3, %s567
      $region52: #{decoder_block_forward.3} parent=43 // pred_fallthru
        _
      // Predicated region
      $region53: #{decoder_block_forward.3} parent=43 // pred_check
        %p569 = pneg %p139
      $region54: #{decoder_block_forward.3} parent=43 // pred_check_branch
        %571 = sbr.rel (%p569) target = $region56
      $region55: #{decoder_block_forward.3} parent=43 // pred_region
        %p572 = scmp.lt.s32.totalorder %s17, 1
        %s573 = scalar_select %p572, %s17, 1
        %s574 = scalar_lea.vmem %s4, %s573
      $region56: #{decoder_block_forward.3} parent=43 // pred_fallthru
        _
    $region44: #{decoder_block_forward.3} parent=5 // pred_fallthru
      _
  $region6: #{decoder_block_forward.3} parent=0 // loop_footer
    %s15 = sadd.s32 1, %s11
  $region7: #{decoder_block_forward.3} parent=0 // loop_footer_branch
    %10 = sbr.rel target = $region3
  $region8: #{decoder_block_forward.3} parent=0 // loop_exit
    _

// kernel: decoder_block_forward.5
$region0: #{decoder_block_forward.5}
  #allocation0 [shape = 'u32[]', space=smem, size = 0x4, offset = 0x4, fixed_abs, tag = 'smem constant byte address 0x4 - core index']
  #allocation1 [shape = 'u32[144,128]{1,0:T(1,128)}', space=vmem, size = 0x12000, scoped, tag = 'internal scratch']
  %s0 = inlined_call_operand.vmem [shape: bf16[2,12,96], index: 0, kind: input, shape index: {}]
  %s1 = inlined_call_operand.vmem [shape: f32[96,192], index: 1, kind: input, shape index: {}]
  %s2 = inlined_call_operand.vmem [shape: f32[1,192], index: 2, kind: input, shape index: {}]
  %s3 = inlined_call_operand.vmem [shape: f32[1,96], index: 3, kind: input, shape index: {}]
  %s4 = inlined_call_operand.vmem [shape: f32[1,96], index: 4, kind: input, shape index: {}]
  %s5 = inlined_call_operand.vmem [shape: f32[2,12,192], index: 5, kind: output, shape index: {}]
  %s6 = sld [smem:[#allocation0]]
  $region53: #{decoder_block_forward.5} parent=0
    _
  %s8 = ssub.s32 1, %s6
  %s9 = scalar_select 0, %s8, %s6
  loop: start=0, step=1, limit=4
  $region2: #{decoder_block_forward.5} parent=0 // loop_pre_header
    _
  $region3: #{decoder_block_forward.5} parent=0 // loop_header
    %s11 = sphi 0, %s15
    %p12 = scmp.ge.s32.totalorder %s11, 4
    %s21 = sphi 0, %s23
    %s24 = sphi 0, %s21
    %s25 = sphi 0, %s24
    %s41 = sphi 0, %s25
    %s45 = sphi 0, %s45
    %s47 = sphi 0, %s45
    %s48 = sphi 0, %s47
    %s62 = sphi 0, %s48
    %s66 = sphi 0, %s66
    %s68 = sphi 0, %s66
    %s69 = sphi 0, %s68
    %s83 = sphi 0, %s69
    %s87 = sphi 0, %s87
    %s89 = sphi 0, %s87
    %s90 = sphi 0, %s89
    %s104 = sphi 0, %s90
    %s108 = sphi 0, %s108
    %s110 = sphi 0, %s108
    %s111 = sphi 0, %s110
    %s125 = sphi 0, %s111
    %s131 = sphi 0, %s133
    %s134 = sphi 0, %s131
    %s135 = sphi 0, %s134
    %s151 = sphi 0, %s135
  $region4: #{decoder_block_forward.5} parent=0 // loop_header_branch
    %14 = sbr.rel (%p12) target = $region8
  $region5: #{decoder_block_forward.5} parent=0 // loop_body
    %s16 = ssub.s32 %s11, 1
    %s17 = ssub.s32 %s11, 2
    %s18 = sadd.s32 %s11, 1
    %s19 = ssub.s32 %s11, %s18
    %p20 = scmp.eq.s32.totalorder %s19, 0
    %s22 = sadd.s32 %s21, 1
    %s23 = scalar_select %p20, %s21, %s22
    %p26 = pneg %p20
    %p27 = scmp.eq.s32.totalorder %s11, 1
    %p28 = por %p26, %p27
    %p29 = scmp.ne.s32.totalorder %s21, %s24
    %p30 = scmp.eq.s32.totalorder %s11, 0
    %p31 = por %p29, %p30
    %p32 = scmp.ne.s32.totalorder %s21, %s24
    %p33 = scmp.eq.s32.totalorder %s16, 1
    %p34 = por %p32, %p33
    %p35 = scmp.ne.s32.totalorder %s24, %s25
    %p36 = scmp.eq.s32.totalorder %s16, 0
    %p37 = por %p35, %p36
    %p38 = scmp.ne.s32.totalorder %s24, %s25
    %p39 = scmp.eq.s32.totalorder %s17, 1
    %p40 = por %p38, %p39
    %p42 = scmp.ne.s32.totalorder %s25, %s41
    %p43 = scmp.eq.s32.totalorder %s17, 0
    %p44 = por %p42, %p43
    %s46 = sadd.s32 %s45, 1
    %p49 = scmp.eq.s32.totalorder %s11, 1
    %p50 = scmp.ne.s32.totalorder %s45, %s47
    %p51 = scmp.eq.s32.totalorder %s11, 0
    %p52 = por %p50, %p51
    %p53 = scmp.ne.s32.totalorder %s45, %s47
    %p54 = scmp.eq.s32.totalorder %s16, 1
    %p55 = por %p53, %p54
    %p56 = scmp.ne.s32.totalorder %s47, %s48
    %p57 = scmp.eq.s32.totalorder %s16, 0
    %p58 = por %p56, %p57
    %p59 = scmp.ne.s32.totalorder %s47, %s48
    %p60 = scmp.eq.s32.totalorder %s17, 1
    %p61 = por %p59, %p60
    %p63 = scmp.ne.s32.totalorder %s48, %s62
    %p64 = scmp.eq.s32.totalorder %s17, 0
    %p65 = por %p63, %p64
    %s67 = sadd.s32 %s66, 1
    %p70 = scmp.eq.s32.totalorder %s11, 1
    %p71 = scmp.ne.s32.totalorder %s66, %s68
    %p72 = scmp.eq.s32.totalorder %s11, 0
    %p73 = por %p71, %p72
    %p74 = scmp.ne.s32.totalorder %s66, %s68
    %p75 = scmp.eq.s32.totalorder %s16, 1
    %p76 = por %p74, %p75
    %p77 = scmp.ne.s32.totalorder %s68, %s69
    %p78 = scmp.eq.s32.totalorder %s16, 0
    %p79 = por %p77, %p78
    %p80 = scmp.ne.s32.totalorder %s68, %s69
    %p81 = scmp.eq.s32.totalorder %s17, 1
    %p82 = por %p80, %p81
    %p84 = scmp.ne.s32.totalorder %s69, %s83
    %p85 = scmp.eq.s32.totalorder %s17, 0
    %p86 = por %p84, %p85
    %s88 = sadd.s32 %s87, 1
    %p91 = scmp.eq.s32.totalorder %s11, 1
    %p92 = scmp.ne.s32.totalorder %s87, %s89
    %p93 = scmp.eq.s32.totalorder %s11, 0
    %p94 = por %p92, %p93
    %p95 = scmp.ne.s32.totalorder %s87, %s89
    %p96 = scmp.eq.s32.totalorder %s16, 1
    %p97 = por %p95, %p96
    %p98 = scmp.ne.s32.totalorder %s89, %s90
    %p99 = scmp.eq.s32.totalorder %s16, 0
    %p100 = por %p98, %p99
    %p101 = scmp.ne.s32.totalorder %s89, %s90
    %p102 = scmp.eq.s32.totalorder %s17, 1
    %p103 = por %p101, %p102
    %p105 = scmp.ne.s32.totalorder %s90, %s104
    %p106 = scmp.eq.s32.totalorder %s17, 0
    %p107 = por %p105, %p106
    %s109 = sadd.s32 %s108, 1
    %p112 = scmp.eq.s32.totalorder %s11, 1
    %p113 = scmp.ne.s32.totalorder %s108, %s110
    %p114 = scmp.eq.s32.totalorder %s11, 0
    %p115 = por %p113, %p114
    %p116 = scmp.ne.s32.totalorder %s108, %s110
    %p117 = scmp.eq.s32.totalorder %s16, 1
    %p118 = por %p116, %p117
    %p119 = scmp.ne.s32.totalorder %s110, %s111
    %p120 = scmp.eq.s32.totalorder %s16, 0
    %p121 = por %p119, %p120
    %p122 = scmp.ne.s32.totalorder %s110, %s111
    %p123 = scmp.eq.s32.totalorder %s17, 1
    %p124 = por %p122, %p123
    %p126 = scmp.ne.s32.totalorder %s111, %s125
    %p127 = scmp.eq.s32.totalorder %s17, 0
    %p128 = por %p126, %p127
    %s129 = ssub.s32 %s11, %s18
    %p130 = scmp.eq.s32.totalorder %s129, 0
    %s132 = sadd.s32 %s131, 1
    %s133 = scalar_select %p130, %s131, %s132
    %p136 = pneg %p130
    %p137 = scmp.eq.s32.totalorder %s11, 1
    %p138 = por %p136, %p137
    %p139 = scmp.ne.s32.totalorder %s131, %s134
    %p140 = scmp.eq.s32.totalorder %s11, 0
    %p141 = por %p139, %p140
    %p142 = scmp.ne.s32.totalorder %s131, %s134
    %p143 = scmp.eq.s32.totalorder %s16, 1
    %p144 = por %p142, %p143
    %p145 = scmp.ne.s32.totalorder %s134, %s135
    %p146 = scmp.eq.s32.totalorder %s16, 0
    %p147 = por %p145, %p146
    %p148 = scmp.ne.s32.totalorder %s134, %s135
    %p149 = scmp.eq.s32.totalorder %s17, 1
    %p150 = por %p148, %p149
    %p152 = scmp.ne.s32.totalorder %s135, %s151
    %p153 = scmp.eq.s32.totalorder %s17, 0
    %p154 = por %p152, %p153
    %p155 = scmp.le.s32.totalorder 1, %s11
    %p156 = scmp.lt.s32.totalorder %s11, 3
    %p157 = pnand %p155, %p156
    %p158 = pneg %p157
    // Predicated region
    $region9: #{decoder_block_forward.5} parent=5 // pred_check
      _
    $region10: #{decoder_block_forward.5} parent=5 // pred_check_branch
      %160 = sbr.rel (%p157) target = $region12
    $region11: #{decoder_block_forward.5} parent=5 // pred_region
      %s161 = ssub.s32 %s11, 1
      // Predicated region
      $region13: #{decoder_block_forward.5} parent=11 // pred_check
        %p162 = pneg %p58
      $region14: #{decoder_block_forward.5} parent=11 // pred_check_branch
        %164 = sbr.rel (%p162) target = $region16
      $region15: #{decoder_block_forward.5} parent=11 // pred_region
        _
      $region16: #{decoder_block_forward.5} parent=11 // pred_fallthru
        _
      // Predicated region
      $region17: #{decoder_block_forward.5} parent=11 // pred_check
        %p165 = pneg %p79
      $region18: #{decoder_block_forward.5} parent=11 // pred_check_branch
        %167 = sbr.rel (%p165) target = $region20
      $region19: #{decoder_block_forward.5} parent=11 // pred_region
        _
      $region20: #{decoder_block_forward.5} parent=11 // pred_fallthru
        _
      // Predicated region
      $region21: #{decoder_block_forward.5} parent=11 // pred_check
        %p168 = pneg %p100
      $region22: #{decoder_block_forward.5} parent=11 // pred_check_branch
        %170 = sbr.rel (%p168) target = $region24
      $region23: #{decoder_block_forward.5} parent=11 // pred_region
        _
      $region24: #{decoder_block_forward.5} parent=11 // pred_fallthru
        _
      // Predicated region
      $region25: #{decoder_block_forward.5} parent=11 // pred_check
        %p171 = pneg %p121
      $region26: #{decoder_block_forward.5} parent=11 // pred_check_branch
        %173 = sbr.rel (%p171) target = $region28
      $region27: #{decoder_block_forward.5} parent=11 // pred_region
        _
      $region28: #{decoder_block_forward.5} parent=11 // pred_fallthru
        _
    $region12: #{decoder_block_forward.5} parent=5 // pred_fallthru
      _
    %p174 = scmp.lt.s32.totalorder %s11, 2
    // Predicated region
    $region29: #{decoder_block_forward.5} parent=5 // pred_check
      %p175 = pneg %p174
    $region30: #{decoder_block_forward.5} parent=5 // pred_check_branch
      %177 = sbr.rel (%p175) target = $region32
    $region31: #{decoder_block_forward.5} parent=5 // pred_region
      // Predicated region
      $region33: #{decoder_block_forward.5} parent=31 // pred_check
        %p178 = pneg %p31
      $region34: #{decoder_block_forward.5} parent=31 // pred_check_branch
        %180 = sbr.rel (%p178) target = $region36
      $region35: #{decoder_block_forward.5} parent=31 // pred_region
        %p181 = scmp.lt.s32.totalorder %s11, 1
        %s182 = scalar_select %p181, %s11, 1
        %s183 = smul.addr %s182, 2
        %s184 = smul.addr %s183, 4
        %s185 = scalar_lea.vmem %s0, %s184
      $region36: #{decoder_block_forward.5} parent=31 // pred_fallthru
        _
    $region32: #{decoder_block_forward.5} parent=5 // pred_fallthru
      _
    %p186 = scmp.le.s32.totalorder 1, %s11
    %p187 = scmp.lt.s32.totalorder %s11, 3
    %p188 = pnand %p186, %p187
    %p189 = pneg %p188
    // Predicated region
    $region37: #{decoder_block_forward.5} parent=5 // pred_check
      _
    $region38: #{decoder_block_forward.5} parent=5 // pred_check_branch
      %191 = sbr.rel (%p188) target = $region40
    $region39: #{decoder_block_forward.5} parent=5 // pred_region
      %s192 = ssub.s32 %s11, 1
      %p193 = scmp.lt.s32.totalorder %s16, 1
      %s194 = scalar_select %p193, %s16, 1
      %s195 = smul.addr %s194, 2
      %s196 = smul.addr %s195, 4
      %s197 = scalar_lea.vmem %s0, %s196
      %p198 = pneg %p37
      %p199 = pneg %p34
      %p200 = pneg %p58
      %p201 = pneg %p55
      %p202 = pneg %p79
      %p203 = pneg %p76
      %p204 = pneg %p100
      %p205 = pneg %p97
      %p206 = pneg %p121
      %p207 = pneg %p118
      %p208 = pneg %p147
      %p209 = pneg %p144
      %p210 = scmp.lt.s32.totalorder %s16, 1
      %s211 = scalar_select %p210, %s16, 1
      %s212 = smul.addr %s211, 4
      %s213 = smul.addr %s212, 8
      %s214 = scalar_lea.vmem %s5, %s213
      %p215 = scmp.lt.s32.totalorder %s16, 1
      %s216 = scalar_select %p215, %s16, 1
      %s217 = smul.addr %s216, 2
      %s218 = smul.addr %s217, 4
      %s219 = scalar_lea.vmem %s0, %s218
      %p220 = scmp.lt.s32.totalorder %s16, 1
      %s221 = scalar_select %p220, %s16, 1
      %s222 = smul.addr %s221, 4
      %s223 = smul.addr %s222, 8
      %s224 = scalar_lea.vmem %s5, %s223
      %v225 = vld [vmem:[%s219] sm:$0xf]
      %v226 = vld [vmem:[%s219 + $0x4] sm:$0x3]
      %v227 = vunpack.c.l.bf16 %v225
      %v228 = vunpack.c.l.bf16 %v226
      %v229 = vld [vmem:[%s3] sm:$0x1]
      %v231 = vlaneseq
      %v232 = vshrl.u32 %v231, 7
      %v233 = vsub.s32 0, %v232
      %v234 = vrot.slane %v229, %v233
      %v236 = vmul.f32 %v227, %v234
      %v237 = vmul.f32 %v228, %v234
      %v238 = vld [vmem:[%s4] sm:$0x1]
      %v240 = vlaneseq
      %v241 = vshrl.u32 %v240, 7
      %v242 = vsub.s32 0, %v241
      %v243 = vrot.slane %v238, %v242
      %v245 = vadd.f32 %v236, %v243
      %v246 = vadd.f32 %v237, %v243
      %v247 = vmax.f32 %v245, 0.0
      %v248 = vmax.f32 %v246, 0.0
      %v249 = vld [vmem:[%s1] sm:$0xff]
      %v250 = vld [vmem:[%s1 + $0x8] sm:$0xff]
      %v251 = vld [vmem:[%s1 + $0x10] sm:$0xff]
      %v252 = vld [vmem:[%s1 + $0x18] sm:$0xff]
      %v253 = vld [vmem:[%s1 + $0x20] sm:$0xff]
      %v254 = vld [vmem:[%s1 + $0x28] sm:$0xff]
      %v255 = vld [vmem:[%s1 + $0x30] sm:$0xff]
      %v256 = vld [vmem:[%s1 + $0x38] sm:$0xff]
      %v257 = vld [vmem:[%s1 + $0x40] sm:$0xff]
      %v258 = vld [vmem:[%s1 + $0x48] sm:$0xff]
      %v259 = vld [vmem:[%s1 + $0x50] sm:$0xff]
      %v260 = vld [vmem:[%s1 + $0x58] sm:$0xff]
      %v261 = vld [vmem:[%s1 + $0x60] sm:$0xff]
      %v262 = vld [vmem:[%s1 + $0x68] sm:$0xff]
      %v263 = vld [vmem:[%s1 + $0x70] sm:$0xff]
      %v264 = vld [vmem:[%s1 + $0x78] sm:$0xff]
      %v265 = vld [vmem:[%s1 + $0x80] sm:$0xff]
      %v266 = vld [vmem:[%s1 + $0x88] sm:$0xff]
      %v267 = vld [vmem:[%s1 + $0x90] sm:$0xff]
      %v268 = vld [vmem:[%s1 + $0x98] sm:$0xff]
      %v269 = vld [vmem:[%s1 + $0xa0] sm:$0xff]
      %v270 = vld [vmem:[%s1 + $0xa8] sm:$0xff]
      %v271 = vld [vmem:[%s1 + $0xb0] sm:$0xff]
      %v272 = vld [vmem:[%s1 + $0xb8] sm:$0xff]
      %v273 = vld [vmem:[%s2] sm:$0x3]
      %v275 = vlaneseq
      %v276 = vshrl.u32 %v275, 7
      %v277 = vsub.s32 0, %v276
      %v278 = vrot.slane %v273, %v277
      %v279 = vlaneseq
      %v280 = vshrl.u32 %v279, 7
      %v281 = vsub.s32 1, %v280
      %v282 = vrot.slane %v273, %v281
      %vm285 = vcmask 785408
      %v287 = vsel %vm285, %v247, 0
      %v290 = vsel %vm285, %v248, 0
      %292 = vmatprep.subr.mxu0 %v250
      %293 = vmatpush1.msra.mxu0 %v249
      %294 = vmatprep.subr.mxu0 %v252
      %295 = vmatpush1.msra.mxu0 %v251
      %296 = vmatprep.subr.mxu0 %v254
      %297 = vmatpush1.msra.mxu0 %v253
      %298 = vmatprep.subr.mxu0 %v256
      %299 = vmatpush1.msra.mxu0 %v255
      %300 = vmatprep.subr.mxu0 %v258
      %301 = vmatpush1.msra.mxu0 %v257
      %302 = vmatprep.subr.mxu0 %v260
      %303 = vmatpush1.msra.mxu0 %v259
      %304 = vmatprep.subr.mxu0 %v262
      %305 = vmatpush1.msra.mxu0 %v261
      %306 = vmatprep.subr.mxu0 %v264
      %307 = vmatpush1.msra.mxu0 %v263
      %308 = vmatprep.subr.mxu0 %v266
      %309 = vmatpush1.msra.mxu0 %v265
      %310 = vmatprep.subr.mxu0 %v268
      %311 = vmatpush1.msra.mxu0 %v267
      %312 = vmatprep.subr.mxu0 %v270
      %313 = vmatpush1.msra.mxu0 %v269
      %314 = vmatprep.subr.mxu0 %v272
      %315 = vmatpush1.msra.mxu0 %v271
      %316 = vmatprep.subr.mxu0 0.0
      %317 = vmatpush1.msra.mxu0 0.0
      %318 = vmatprep.subr.mxu0 0.0
      %319 = vmatpush1.msra.mxu0 0.0
      %320 = vmatprep.subr.mxu0 0.0
      %321 = vmatpush1.msra.mxu0 0.0
      %322 = vmatprep.subr.mxu0 0.0
      %323 = vmatpush1.msra.mxu0 0.0
      %324 = vmatprep.subr.mxu0 0.0
      %325 = vmatpush1.msra.mxu0 0.0
      %326 = vmatprep.subr.mxu0 0.0
      %327 = vmatpush1.msra.mxu0 0.0
      %328 = vmatprep.subr.mxu0 0.0
      %329 = vmatpush1.msra.mxu0 0.0
      %330 = vmatprep.subr.mxu0 0.0
      %331 = vmatpush1.msra.mxu0 0.0
      %332 = vmatprep.subr.mxu0 0.0
      %333 = vmatpush1.msra.mxu0 0.0
      %334 = vmatprep.subr.mxu0 0.0
      %335 = vmatpush1.msra.mxu0 0.0
      %336 = vmatprep.subr.mxu0 0.0
      %337 = vmatpush1.msra.mxu0 0.0
      %338 = vmatprep.subr.mxu0 0.0
      %339 = vmatpush1.msra.mxu0 0.0
      %340 = vmatprep.subr.mxu0 0.0
      %341 = vmatpush1.msra.mxu0 0.0
      %342 = vmatprep.subr.mxu0 0.0
      %343 = vmatpush1.msra.mxu0 0.0
      %344 = vmatprep.subr.mxu0 0.0
      %345 = vmatpush1.msra.mxu0 0.0
      %346 = vmatprep.subr.mxu0 0.0
      %347 = vmatpush1.msra.mxu0 0.0
      %348 = vmatprep.subr.mxu0 0.0
      %349 = vmatpush1.msra.mxu0 0.0
      %350 = vmatprep.subr.mxu0 0.0
      %351 = vmatpush1.msra.mxu0 0.0
      %352 = vmatprep.subr.mxu0 0.0
      %353 = vmatpush1.msra.mxu0 0.0
      %354 = vmatprep.subr.mxu0 0.0
      %355 = vmatpush1.msra.mxu0 0.0
      %356 = vmatprep.mubr.f32.mxu0 0.0
      %357 = vmatmul.mubr.f32.gmra.mrb[0].mxu0 %v287
      %v358 = vpop.f32.mrb[0].mxu0
      %v359 = vadd.f32 %v278, %v358
      %v360 = vpop.f32.mrb[0].mxu0
      %v361 = vadd.f32 %v282, %v360
      %362 = vmatprep.mubr.f32.mxu0 0.0
      %363 = vmatmul.mubr.f32.gmra.mrb[0].mxu0 %v290
      %v364 = vpop.f32.mrb[0].mxu0
      %v365 = vadd.f32 %v278, %v364
      %v366 = vpop.f32.mrb[0].mxu0
      %v367 = vadd.f32 %v282, %v366
      %368 = vdwg.mxu0
      %369 = vst [vmem:[%s224] sm:$0xff] %v359
      %vm370 = vcmask 523264
      %371 = vst.msk [vmem:[%s224 + $0x8] sm:$0xff] %vm370, %v361
      %372 = vst [vmem:[%s224 + $0x10] sm:$0xf] %v365
      %vm373 = vcmask 519168
      %374 = vst.msk [vmem:[%s224 + $0x18] sm:$0xf] %vm373, %v367
      %p375 = scmp.lt.s32.totalorder %s16, 1
      %s376 = scalar_select %p375, %s16, 1
      %s377 = smul.addr %s376, 4
      %s378 = smul.addr %s377, 8
      %s379 = scalar_lea.vmem %s5, %s378
      // Predicated region
      $region41: #{decoder_block_forward.5} parent=39 // pred_check
        %p380 = pneg %p144
      $region42: #{decoder_block_forward.5} parent=39 // pred_check_branch
        %382 = sbr.rel (%p380) target = $region44
      $region43: #{decoder_block_forward.5} parent=39 // pred_region
        _
      $region44: #{decoder_block_forward.5} parent=39 // pred_fallthru
        _
    $region40: #{decoder_block_forward.5} parent=5 // pred_fallthru
      _
    %p383 = scmp.le.s32.totalorder 2, %s11
    // Predicated region
    $region45: #{decoder_block_forward.5} parent=5 // pred_check
      %p384 = pneg %p383
    $region46: #{decoder_block_forward.5} parent=5 // pred_check_branch
      %386 = sbr.rel (%p384) target = $region48
    $region47: #{decoder_block_forward.5} parent=5 // pred_region
      %s387 = ssub.s32 %s11, 2
      // Predicated region
      $region49: #{decoder_block_forward.5} parent=47 // pred_check
        %p388 = pneg %p150
      $region50: #{decoder_block_forward.5} parent=47 // pred_check_branch
        %390 = sbr.rel (%p388) target = $region52
      $region51: #{decoder_block_forward.5} parent=47 // pred_region
        %p391 = scmp.lt.s32.totalorder %s17, 1
        %s392 = scalar_select %p391, %s17, 1
        %s393 = smul.addr %s392, 4
        %s394 = smul.addr %s393, 8
        %s395 = scalar_lea.vmem %s5, %s394
      $region52: #{decoder_block_forward.5} parent=47 // pred_fallthru
        _
    $region48: #{decoder_block_forward.5} parent=5 // pred_fallthru
      _
  $region6: #{decoder_block_forward.5} parent=0 // loop_footer
    %s15 = sadd.s32 1, %s11
  $region7: #{decoder_block_forward.5} parent=0 // loop_footer_branch
    %10 = sbr.rel target = $region3
  $region8: #{decoder_block_forward.5} parent=0 // loop_exit
    _

</llo_original>
